<compile_context>
chip_gen: v5e
topology: v5e:2x2
jax: 0.10.0
libtpu: 0.0.40
codegen_flags: <defaults>
</compile_context>

<pallas_src>
import jax
import jax.numpy as jnp
from jax import lax
from jax.experimental import pallas as pl
from jax.experimental.pallas import tpu as pltpu

# ---- small synthetic CLIP-text config -------------------------------------
VOCAB = 64          # (real: 49408)
SEQ = 8             # (real: 77)
D = 32              # hidden   (real: 768)
HEADS = 4           # (real: 12)
HEAD_DIM = D // HEADS
MLP = 4 * D         # (real: 3072)
LAYERS = 2          # (real: 12)
PROJ = 32           # text_projection dim (real: 768)
PROJ_PAD = 128      # lane-dense output slab; wrapper slices back to PROJ
BATCH = 2
LN_EPS = 1e-5

BS = BATCH * SEQ    # rows of the resident activation slab


def _layernorm(x, g, b):
    mu = jnp.mean(x, axis=-1, keepdims=True)
    var = jnp.mean((x - mu) ** 2, axis=-1, keepdims=True)
    return (x - mu) * lax.rsqrt(var + LN_EPS) * g + b


def _bf16(x):
    return x.astype(jnp.bfloat16)


# ---------------- fused Pallas kernel: full CLIP text encoder ---------------
def clip_text_kernel(eot_ref,                          # scalar prefetch (SMEM)
                     x_ref,                            # (B*S, D) embeddings f32
                     ln1_g, ln1_b, wqkv, bqkv, wo, bo,
                     ln2_g, ln2_b, w1, b1, w2, b2,     # stacked on LAYERS axis
                     lnf_g, lnf_b, proj,               # final-head params
                     feat_ref):                        # out: (B, PROJ_PAD) f32
    x = x_ref[...].astype(jnp.float32)                 # (BS, D) residual stream
    scale = jnp.float32(HEAD_DIM ** -0.5)
    neg = jnp.float32(-1e30)

    # ---- structural constants, built ONCE per kernel call (hoisted) --------
    row_s = lax.broadcasted_iota(jnp.int32, (1, SEQ, SEQ), 1)    # query pos
    col_s = lax.broadcasted_iota(jnp.int32, (1, SEQ, SEQ), 2)    # key pos
    causal = col_s <= row_s                                      # (1, S, S)

    # ---- transformer layers (static unrolled loop; grid is (1,)) -----------
    for l in range(LAYERS):
        # ----- pre-LN causal multi-head self-attention -----
        h = _layernorm(x, ln1_g[l], ln1_b[l])
        qkv = jnp.dot(_bf16(h), wqkv[l],
                      preferred_element_type=jnp.float32) + bqkv[l]   # (BS, 3D)

        head_outs = []
        for hd in range(HEADS):
            q2 = qkv[:, hd * HEAD_DIM:(hd + 1) * HEAD_DIM] * scale
            k2 = qkv[:, D + hd * HEAD_DIM: D + (hd + 1) * HEAD_DIM]
            v2 = qkv[:, 2 * D + hd * HEAD_DIM: 2 * D + (hd + 1) * HEAD_DIM]
            q3 = _bf16(q2.reshape(BATCH, SEQ, HEAD_DIM))
            k3 = _bf16(k2.reshape(BATCH, SEQ, HEAD_DIM))
            v3 = _bf16(v2.reshape(BATCH, SEQ, HEAD_DIM))

            s = jnp.einsum('bqd,bkd->bqk', q3, k3,
                           preferred_element_type=jnp.float32)    # (B, S, S)
            s = jnp.where(causal, s, neg)
            s = s - jnp.max(s, axis=-1, keepdims=True)
            p = jnp.exp(s)
            p = p * pl.reciprocal(jnp.sum(p, axis=-1, keepdims=True),
                                  approx=True)
            o = jnp.einsum('bqk,bkd->bqd', _bf16(p), v3,
                           preferred_element_type=jnp.float32)    # (B, S, Hd)
            head_outs.append(o.reshape(BS, HEAD_DIM))

        attn = jnp.concatenate(head_outs, axis=-1)                # (BS, D)
        attn = jnp.dot(_bf16(attn), wo[l],
                       preferred_element_type=jnp.float32) + bo[l]
        x = x + attn

        # ----- pre-LN MLP with quick-GELU -----
        h2 = _layernorm(x, ln2_g[l], ln2_b[l])
        h2 = jnp.dot(_bf16(h2), w1[l],
                     preferred_element_type=jnp.float32) + b1[l]
        h2 = h2 * jax.nn.sigmoid(1.702 * h2)                      # quick_gelu
        h2 = jnp.dot(_bf16(h2), w2[l],
                     preferred_element_type=jnp.float32) + b2[l]
        x = x + h2

    # ---- EOS pooling (one-hot matmul) + final LayerNorm + projection -------
    row = lax.broadcasted_iota(jnp.int32, (BATCH, BS), 0)
    col = lax.broadcasted_iota(jnp.int32, (BATCH, BS), 1)
    sel = (row == 0) & (col == eot_ref[0])
    for b in range(1, BATCH):
        sel = sel | ((row == b) & (col == b * SEQ + eot_ref[b]))
    onehot = sel.astype(jnp.bfloat16)                             # (B, BS)

    pooled = jnp.dot(onehot, _bf16(x),
                     preferred_element_type=jnp.float32)          # (B, D)
    pooled = _layernorm(pooled, lnf_g[...], lnf_b[...])
    feat_ref[...] = jnp.dot(_bf16(pooled), proj[...],
                            preferred_element_type=jnp.float32
                            ).astype(feat_ref.dtype)              # (B, PROJ_PAD)


def clip_text_encoder(x_embed, eot, params):
    """x_embed: (B, S, D) f32 embeddings; eot: (B,) int32 EOS positions."""
    layer_stack = params["layer_stack"]

    # pad text_projection to a lane-dense (D, 128) slab
    proj_pad = jnp.zeros((D, PROJ_PAD), jnp.bfloat16)
    proj_pad = proj_pad.at[:, :PROJ].set(params["text_projection"])
    head = (params["ln_final_g"], params["ln_final_b"], proj_pad)

    x2d = x_embed.reshape(BS, D).astype(jnp.float32)

    def _full_spec(p):
        nd = p.ndim
        return pl.BlockSpec(p.shape, lambda i, e, _nd=nd: (0,) * _nd)

    in_specs = [pl.BlockSpec((BS, D), lambda i, e: (0, 0))]
    in_specs += [_full_spec(p) for p in layer_stack]
    in_specs += [_full_spec(p) for p in head]

    grid_spec = pltpu.PrefetchScalarGridSpec(
        num_scalar_prefetch=1,
        grid=(1,),                                   # toy size: one grid step
        in_specs=in_specs,
        out_specs=pl.BlockSpec((BATCH, PROJ_PAD), lambda i, e: (0, 0)),
    )
    feats = pl.pallas_call(
        clip_text_kernel,
        out_shape=jax.ShapeDtypeStruct((BATCH, PROJ_PAD), jnp.float32),
        grid_spec=grid_spec,
        compiler_params=pltpu.CompilerParams(
            dimension_semantics=("arbitrary",)),
    )(eot, x2d, *layer_stack, *head)
    return feats[:, :PROJ]


# --------------------------- parameters & glue ------------------------------
def init_params(key):
    keys = iter(jax.random.split(key, 16))

    def nrm(shape, dtype=jnp.bfloat16, scale=0.02):
        return (scale * jax.random.normal(next(keys), shape, jnp.float32)
                ).astype(dtype)

    ones = lambda s: jnp.ones(s, jnp.float32)
    zeros = lambda s: jnp.zeros(s, jnp.float32)

    # per-layer params stacked on a leading LAYERS axis; matmul weights in
    # bf16 (MXU-native, half the DMA bytes), LN/bias in f32. q/k/v are fused
    # into one (D, 3D) weight (+ one (3D,) bias) -> single QKV matmul.
    layer_stack = [
        ones((LAYERS, 1, D)), zeros((LAYERS, 1, D)),        # ln1 g, b
        nrm((LAYERS, D, 3 * D)), zeros((LAYERS, 1, 3 * D)), # wqkv, bqkv
        nrm((LAYERS, D, D)), zeros((LAYERS, 1, D)),         # wo, bo
        ones((LAYERS, 1, D)), zeros((LAYERS, 1, D)),        # ln2 g, b
        nrm((LAYERS, D, MLP)), zeros((LAYERS, 1, MLP)),     # fc1
        nrm((LAYERS, MLP, D)), zeros((LAYERS, 1, D)),       # fc2
    ]
    return {
        "token_embedding": nrm((VOCAB, D), jnp.float32),
        "position_embedding": nrm((SEQ, D), jnp.float32),
        "layer_stack": layer_stack,
        "ln_final_g": ones((1, D)),
        "ln_final_b": zeros((1, D)),
        "text_projection": nrm((D, PROJ)),
    }


def make_input_ids(key):
    # synthetic "tokenizer('swz')": [BOS, tok..., EOS, pad...]
    ids = jax.random.randint(key, (BATCH, SEQ), 1, VOCAB - 2)
    ids = ids.at[:, 0].set(VOCAB - 2)                          # BOS
    eos_pos = jnp.array([4, SEQ - 1], dtype=jnp.int32)
    pos = jnp.arange(SEQ)[None, :]
    ids = jnp.where(pos > eos_pos[:, None], 0, ids)            # pad after EOS
    ids = jnp.where(pos == eos_pos[:, None], VOCAB - 1, ids)   # EOS (largest id)
    return ids.astype(jnp.int32)


@jax.jit
def get_text_features(input_ids, params):
    x = jnp.take(params["token_embedding"], input_ids, axis=0)    # (B, S, D)
    x = x + params["position_embedding"][None]
    # CLIP pools at EOS token = argmax over input_ids (EOS has the largest id)
    eot = jnp.argmax(input_ids, axis=-1).astype(jnp.int32)        # (B,)
    return clip_text_encoder(x, eot, params)


if __name__ == "__main__":
    key = jax.random.PRNGKey(0)
    k_param, k_tok = jax.random.split(key)
    params = init_params(k_param)
    input_ids = make_input_ids(k_tok)

    feats = get_text_features(input_ids, params)
    feats = jax.block_until_ready(feats)

    assert feats.shape == (BATCH, PROJ), feats.shape
    assert bool(jnp.all(jnp.isfinite(feats)))
    print("KERNEL_OK")
</pallas_src>

<mosaic_0001>
module attributes {stable_mosaic.version = 11 : i64} {
  func.func @clip_text_kernel(%arg0: i32, %arg1: memref<2xi32, #tpu.memory_space<smem>>, %arg2: memref<16x32xf32, #tpu.memory_space<vmem>>, %arg3: memref<2x1x32xf32, #tpu.memory_space<vmem>>, %arg4: memref<2x1x32xf32, #tpu.memory_space<vmem>>, %arg5: memref<2x32x96xbf16, #tpu.memory_space<vmem>>, %arg6: memref<2x1x96xf32, #tpu.memory_space<vmem>>, %arg7: memref<2x32x32xbf16, #tpu.memory_space<vmem>>, %arg8: memref<2x1x32xf32, #tpu.memory_space<vmem>>, %arg9: memref<2x1x32xf32, #tpu.memory_space<vmem>>, %arg10: memref<2x1x32xf32, #tpu.memory_space<vmem>>, %arg11: memref<2x32x128xbf16, #tpu.memory_space<vmem>>, %arg12: memref<2x1x128xf32, #tpu.memory_space<vmem>>, %arg13: memref<2x128x32xbf16, #tpu.memory_space<vmem>>, %arg14: memref<2x1x32xf32, #tpu.memory_space<vmem>>, %arg15: memref<1x32xf32, #tpu.memory_space<vmem>>, %arg16: memref<1x32xf32, #tpu.memory_space<vmem>>, %arg17: memref<32x128xbf16, #tpu.memory_space<vmem>>, %arg18: memref<2x128xf32, #tpu.memory_space<vmem>>) attributes {dimension_semantics = [#tpu.dimension_semantics<arbitrary>], iteration_bounds = array<i64: 1>, scalar_prefetch = 1 : i64, scratch_operands = 0 : i64, tpu.core_type = #tpu.core_type<tc>, window_params = [{pipeline_mode = #tpu.pipeline_mode<synchronous>, transform_indices = @transform_0, window_bounds = array<i64: 16, 32>}, {pipeline_mode = #tpu.pipeline_mode<synchronous>, transform_indices = @transform_1, window_bounds = array<i64: 2, 1, 32>}, {pipeline_mode = #tpu.pipeline_mode<synchronous>, transform_indices = @transform_2, window_bounds = array<i64: 2, 1, 32>}, {pipeline_mode = #tpu.pipeline_mode<synchronous>, transform_indices = @transform_3, window_bounds = array<i64: 2, 32, 96>}, {pipeline_mode = #tpu.pipeline_mode<synchronous>, transform_indices = @transform_4, window_bounds = array<i64: 2, 1, 96>}, {pipeline_mode = #tpu.pipeline_mode<synchronous>, transform_indices = @transform_5, window_bounds = array<i64: 2, 32, 32>}, {pipeline_mode = #tpu.pipeline_mode<synchronous>, transform_indices = @transform_6, window_bounds = array<i64: 2, 1, 32>}, {pipeline_mode = #tpu.pipeline_mode<synchronous>, transform_indices = @transform_7, window_bounds = array<i64: 2, 1, 32>}, {pipeline_mode = #tpu.pipeline_mode<synchronous>, transform_indices = @transform_8, window_bounds = array<i64: 2, 1, 32>}, {pipeline_mode = #tpu.pipeline_mode<synchronous>, transform_indices = @transform_9, window_bounds = array<i64: 2, 32, 128>}, {pipeline_mode = #tpu.pipeline_mode<synchronous>, transform_indices = @transform_10, window_bounds = array<i64: 2, 1, 128>}, {pipeline_mode = #tpu.pipeline_mode<synchronous>, transform_indices = @transform_11, window_bounds = array<i64: 2, 128, 32>}, {pipeline_mode = #tpu.pipeline_mode<synchronous>, transform_indices = @transform_12, window_bounds = array<i64: 2, 1, 32>}, {pipeline_mode = #tpu.pipeline_mode<synchronous>, transform_indices = @transform_13, window_bounds = array<i64: 1, 32>}, {pipeline_mode = #tpu.pipeline_mode<synchronous>, transform_indices = @transform_14, window_bounds = array<i64: 1, 32>}, {pipeline_mode = #tpu.pipeline_mode<synchronous>, transform_indices = @transform_15, window_bounds = array<i64: 32, 128>}, {pipeline_mode = #tpu.pipeline_mode<synchronous>, transform_indices = @transform_16, window_bounds = array<i64: 2, 128>}]} {
    %c0 = arith.constant 0 : index
    %c0_0 = arith.constant 0 : index
    %0 = vector.load %arg2[%c0, %c0_0] : memref<16x32xf32, #tpu.memory_space<vmem>>, vector<16x32xf32>
    %1 = tpu.iota {dimensions = array<i32: 1>} : vector<1x8x8xi32>
    %2 = tpu.iota {dimensions = array<i32: 2>} : vector<1x8x8xi32>
    %3 = arith.cmpi sle, %2, %1 : vector<1x8x8xi32>
    %c0_1 = arith.constant 0 : index
    %c0_2 = arith.constant 0 : index
    %c0_3 = arith.constant 0 : index
    %4 = vector.load %arg3[%c0_1, %c0_2, %c0_3] : memref<2x1x32xf32, #tpu.memory_space<vmem>>, vector<1x1x32xf32>
    %5 = vector.shape_cast %4 : vector<1x1x32xf32> to vector<1x32xf32>
    %c0_4 = arith.constant 0 : index
    %c0_5 = arith.constant 0 : index
    %c0_6 = arith.constant 0 : index
    %6 = vector.load %arg4[%c0_4, %c0_5, %c0_6] : memref<2x1x32xf32, #tpu.memory_space<vmem>>, vector<1x1x32xf32>
    %7 = vector.shape_cast %6 : vector<1x1x32xf32> to vector<1x32xf32>
    %cst = arith.constant dense<0.000000e+00> : vector<16xf32>
    %8 = vector.multi_reduction <add>, %0, %cst [1] : vector<16x32xf32> to vector<16xf32>
    %9 = vector.shape_cast %8 : vector<16xf32> to vector<16x1xf32>
    %cst_7 = arith.constant 3.200000e+01 : f32
    %10 = vector.broadcast %cst_7 : f32 to vector<16x1xf32>
    %11 = arith.divf %9, %10 : vector<16x1xf32>
    %12 = vector.broadcast %11 : vector<16x1xf32> to vector<16x32xf32>
    %13 = arith.subf %0, %12 : vector<16x32xf32>
    %14 = arith.mulf %13, %13 : vector<16x32xf32>
    %cst_8 = arith.constant dense<0.000000e+00> : vector<16xf32>
    %15 = vector.multi_reduction <add>, %14, %cst_8 [1] : vector<16x32xf32> to vector<16xf32>
    %16 = vector.shape_cast %15 : vector<16xf32> to vector<16x1xf32>
    %cst_9 = arith.constant 3.200000e+01 : f32
    %17 = vector.broadcast %cst_9 : f32 to vector<16x1xf32>
    %18 = arith.divf %16, %17 : vector<16x1xf32>
    %19 = vector.broadcast %11 : vector<16x1xf32> to vector<16x32xf32>
    %20 = arith.subf %0, %19 : vector<16x32xf32>
    %cst_10 = arith.constant 9.99999974E-6 : f32
    %21 = vector.broadcast %cst_10 : f32 to vector<16x1xf32>
    %22 = arith.addf %18, %21 : vector<16x1xf32>
    %23 = math.rsqrt %22 : vector<16x1xf32>
    %24 = vector.broadcast %23 : vector<16x1xf32> to vector<16x32xf32>
    %25 = arith.mulf %20, %24 : vector<16x32xf32>
    %26 = vector.broadcast %5 : vector<1x32xf32> to vector<16x32xf32>
    %27 = arith.mulf %25, %26 : vector<16x32xf32>
    %28 = vector.broadcast %7 : vector<1x32xf32> to vector<16x32xf32>
    %29 = arith.addf %27, %28 : vector<16x32xf32>
    %30 = arith.truncf %29 : vector<16x32xf32> to vector<16x32xbf16>
    %c0_11 = arith.constant 0 : index
    %c0_12 = arith.constant 0 : index
    %c0_13 = arith.constant 0 : index
    %31 = vector.load %arg5[%c0_11, %c0_12, %c0_13] : memref<2x32x96xbf16, #tpu.memory_space<vmem>>, vector<1x32x96xbf16>
    %32 = vector.shape_cast %31 : vector<1x32x96xbf16> to vector<32x96xbf16>
    %cst_14 = arith.constant dense<0.000000e+00> : vector<16x96xf32>
    %33 = tpu.matmul %30, %32, %cst_14 {dimension_numbers = #tpu.dot_dimension_numbers<[1], [0], [0], [1], [0, 0, 1, 1], [], []>} : vector<16x32xbf16>, vector<32x96xbf16>, vector<16x96xf32> -> vector<16x96xf32>
    %c0_15 = arith.constant 0 : index
    %c0_16 = arith.constant 0 : index
    %c0_17 = arith.constant 0 : index
    %34 = vector.load %arg6[%c0_15, %c0_16, %c0_17] : memref<2x1x96xf32, #tpu.memory_space<vmem>>, vector<1x1x96xf32>
    %35 = vector.shape_cast %34 : vector<1x1x96xf32> to vector<1x96xf32>
    %36 = vector.broadcast %35 : vector<1x96xf32> to vector<16x96xf32>
    %37 = arith.addf %33, %36 : vector<16x96xf32>
    %38 = vector.extract_strided_slice %37 {offsets = [0, 0], sizes = [16, 8], strides = [1, 1]} : vector<16x96xf32> to vector<16x8xf32>
    %cst_18 = arith.constant 0.353553385 : f32
    %39 = vector.broadcast %cst_18 : f32 to vector<16x8xf32>
    %40 = arith.mulf %38, %39 : vector<16x8xf32>
    %41 = vector.extract_strided_slice %37 {offsets = [0, 32], sizes = [16, 8], strides = [1, 1]} : vector<16x96xf32> to vector<16x8xf32>
    %42 = vector.extract_strided_slice %37 {offsets = [0, 64], sizes = [16, 8], strides = [1, 1]} : vector<16x96xf32> to vector<16x8xf32>
    %43 = vector.shape_cast %40 : vector<16x8xf32> to vector<2x8x8xf32>
    %44 = arith.truncf %43 : vector<2x8x8xf32> to vector<2x8x8xbf16>
    %45 = vector.shape_cast %41 : vector<16x8xf32> to vector<2x8x8xf32>
    %46 = arith.truncf %45 : vector<2x8x8xf32> to vector<2x8x8xbf16>
    %47 = vector.shape_cast %42 : vector<16x8xf32> to vector<2x8x8xf32>
    %48 = arith.truncf %47 : vector<2x8x8xf32> to vector<2x8x8xbf16>
    "tpu.trace_start"() <{level = 10 : i32, message = "bqd,bkd->bqk"}> : () -> ()
    %cst_19 = arith.constant dense<0.000000e+00> : vector<2x8x8xf32>
    %49 = tpu.matmul %44, %46, %cst_19 {dimension_numbers = #tpu.dot_dimension_numbers<[2], [2], [1], [1], [0, 0, 0, 1, 1, 1], [0], [0]>} : vector<2x8x8xbf16>, vector<2x8x8xbf16>, vector<2x8x8xf32> -> vector<2x8x8xf32>
    %cst_20 = arith.constant -1.000000e+30 : f32
    "tpu.trace_stop"() : () -> ()
    %50 = vector.shape_cast %3 : vector<1x8x8xi1> to vector<1x8x8xi1>
    %51 = vector.broadcast %50 : vector<1x8x8xi1> to vector<2x8x8xi1>
    %52 = vector.broadcast %cst_20 : f32 to vector<2x8x8xf32>
    %53 = arith.select %51, %49, %52 : vector<2x8x8xi1>, vector<2x8x8xf32>
    %cst_21 = arith.constant dense<0xFF800000> : vector<2x8xf32>
    %54 = vector.multi_reduction <maximumf>, %53, %cst_21 [2] : vector<2x8x8xf32> to vector<2x8xf32>
    %55 = vector.shape_cast %54 : vector<2x8xf32> to vector<2x8x1xf32>
    %56 = vector.broadcast %55 : vector<2x8x1xf32> to vector<2x8x8xf32>
    %57 = arith.subf %53, %56 : vector<2x8x8xf32>
    %58 = math.exp %57 : vector<2x8x8xf32>
    %cst_22 = arith.constant dense<0.000000e+00> : vector<2x8xf32>
    %59 = vector.multi_reduction <add>, %58, %cst_22 [2] : vector<2x8x8xf32> to vector<2x8xf32>
    %60 = vector.shape_cast %59 : vector<2x8xf32> to vector<2x8x1xf32>
    %61 = tpu.reciprocal %60 {approx = true} : vector<2x8x1xf32> -> vector<2x8x1xf32>
    %62 = vector.broadcast %61 : vector<2x8x1xf32> to vector<2x8x8xf32>
    %63 = arith.mulf %58, %62 : vector<2x8x8xf32>
    %64 = arith.truncf %63 : vector<2x8x8xf32> to vector<2x8x8xbf16>
    "tpu.trace_start"() <{level = 10 : i32, message = "bqk,bkd->bqd"}> : () -> ()
    %cst_23 = arith.constant dense<0.000000e+00> : vector<2x8x8xf32>
    %65 = tpu.matmul %64, %48, %cst_23 {dimension_numbers = #tpu.dot_dimension_numbers<[2], [1], [1], [2], [0, 0, 0, 1, 1, 2], [0], [0]>} : vector<2x8x8xbf16>, vector<2x8x8xbf16>, vector<2x8x8xf32> -> vector<2x8x8xf32>
    "tpu.trace_stop"() : () -> ()
    %66 = vector.shape_cast %65 : vector<2x8x8xf32> to vector<16x8xf32>
    %67 = vector.extract_strided_slice %37 {offsets = [0, 8], sizes = [16, 8], strides = [1, 1]} : vector<16x96xf32> to vector<16x8xf32>
    %cst_24 = arith.constant 0.353553385 : f32
    %68 = vector.broadcast %cst_24 : f32 to vector<16x8xf32>
    %69 = arith.mulf %67, %68 : vector<16x8xf32>
    %70 = vector.extract_strided_slice %37 {offsets = [0, 40], sizes = [16, 8], strides = [1, 1]} : vector<16x96xf32> to vector<16x8xf32>
    %71 = vector.extract_strided_slice %37 {offsets = [0, 72], sizes = [16, 8], strides = [1, 1]} : vector<16x96xf32> to vector<16x8xf32>
    %72 = vector.shape_cast %69 : vector<16x8xf32> to vector<2x8x8xf32>
    %73 = arith.truncf %72 : vector<2x8x8xf32> to vector<2x8x8xbf16>
    %74 = vector.shape_cast %70 : vector<16x8xf32> to vector<2x8x8xf32>
    %75 = arith.truncf %74 : vector<2x8x8xf32> to vector<2x8x8xbf16>
    %76 = vector.shape_cast %71 : vector<16x8xf32> to vector<2x8x8xf32>
    %77 = arith.truncf %76 : vector<2x8x8xf32> to vector<2x8x8xbf16>
    "tpu.trace_start"() <{level = 10 : i32, message = "bqd,bkd->bqk"}> : () -> ()
    %cst_25 = arith.constant dense<0.000000e+00> : vector<2x8x8xf32>
    %78 = tpu.matmul %73, %75, %cst_25 {dimension_numbers = #tpu.dot_dimension_numbers<[2], [2], [1], [1], [0, 0, 0, 1, 1, 1], [0], [0]>} : vector<2x8x8xbf16>, vector<2x8x8xbf16>, vector<2x8x8xf32> -> vector<2x8x8xf32>
    %cst_26 = arith.constant -1.000000e+30 : f32
    "tpu.trace_stop"() : () -> ()
    %79 = vector.shape_cast %3 : vector<1x8x8xi1> to vector<1x8x8xi1>
    %80 = vector.broadcast %79 : vector<1x8x8xi1> to vector<2x8x8xi1>
    %81 = vector.broadcast %cst_26 : f32 to vector<2x8x8xf32>
    %82 = arith.select %80, %78, %81 : vector<2x8x8xi1>, vector<2x8x8xf32>
    %cst_27 = arith.constant dense<0xFF800000> : vector<2x8xf32>
    %83 = vector.multi_reduction <maximumf>, %82, %cst_27 [2] : vector<2x8x8xf32> to vector<2x8xf32>
    %84 = vector.shape_cast %83 : vector<2x8xf32> to vector<2x8x1xf32>
    %85 = vector.broadcast %84 : vector<2x8x1xf32> to vector<2x8x8xf32>
    %86 = arith.subf %82, %85 : vector<2x8x8xf32>
    %87 = math.exp %86 : vector<2x8x8xf32>
    %cst_28 = arith.constant dense<0.000000e+00> : vector<2x8xf32>
    %88 = vector.multi_reduction <add>, %87, %cst_28 [2] : vector<2x8x8xf32> to vector<2x8xf32>
    %89 = vector.shape_cast %88 : vector<2x8xf32> to vector<2x8x1xf32>
    %90 = tpu.reciprocal %89 {approx = true} : vector<2x8x1xf32> -> vector<2x8x1xf32>
    %91 = vector.broadcast %90 : vector<2x8x1xf32> to vector<2x8x8xf32>
    %92 = arith.mulf %87, %91 : vector<2x8x8xf32>
    %93 = arith.truncf %92 : vector<2x8x8xf32> to vector<2x8x8xbf16>
    "tpu.trace_start"() <{level = 10 : i32, message = "bqk,bkd->bqd"}> : () -> ()
    %cst_29 = arith.constant dense<0.000000e+00> : vector<2x8x8xf32>
    %94 = tpu.matmul %93, %77, %cst_29 {dimension_numbers = #tpu.dot_dimension_numbers<[2], [1], [1], [2], [0, 0, 0, 1, 1, 2], [0], [0]>} : vector<2x8x8xbf16>, vector<2x8x8xbf16>, vector<2x8x8xf32> -> vector<2x8x8xf32>
    "tpu.trace_stop"() : () -> ()
    %95 = vector.shape_cast %94 : vector<2x8x8xf32> to vector<16x8xf32>
    %96 = vector.extract_strided_slice %37 {offsets = [0, 16], sizes = [16, 8], strides = [1, 1]} : vector<16x96xf32> to vector<16x8xf32>
    %cst_30 = arith.constant 0.353553385 : f32
    %97 = vector.broadcast %cst_30 : f32 to vector<16x8xf32>
    %98 = arith.mulf %96, %97 : vector<16x8xf32>
    %99 = vector.extract_strided_slice %37 {offsets = [0, 48], sizes = [16, 8], strides = [1, 1]} : vector<16x96xf32> to vector<16x8xf32>
    %100 = vector.extract_strided_slice %37 {offsets = [0, 80], sizes = [16, 8], strides = [1, 1]} : vector<16x96xf32> to vector<16x8xf32>
    %101 = vector.shape_cast %98 : vector<16x8xf32> to vector<2x8x8xf32>
    %102 = arith.truncf %101 : vector<2x8x8xf32> to vector<2x8x8xbf16>
    %103 = vector.shape_cast %99 : vector<16x8xf32> to vector<2x8x8xf32>
    %104 = arith.truncf %103 : vector<2x8x8xf32> to vector<2x8x8xbf16>
    %105 = vector.shape_cast %100 : vector<16x8xf32> to vector<2x8x8xf32>
    %106 = arith.truncf %105 : vector<2x8x8xf32> to vector<2x8x8xbf16>
    "tpu.trace_start"() <{level = 10 : i32, message = "bqd,bkd->bqk"}> : () -> ()
    %cst_31 = arith.constant dense<0.000000e+00> : vector<2x8x8xf32>
    %107 = tpu.matmul %102, %104, %cst_31 {dimension_numbers = #tpu.dot_dimension_numbers<[2], [2], [1], [1], [0, 0, 0, 1, 1, 1], [0], [0]>} : vector<2x8x8xbf16>, vector<2x8x8xbf16>, vector<2x8x8xf32> -> vector<2x8x8xf32>
    %cst_32 = arith.constant -1.000000e+30 : f32
    "tpu.trace_stop"() : () -> ()
    %108 = vector.shape_cast %3 : vector<1x8x8xi1> to vector<1x8x8xi1>
    %109 = vector.broadcast %108 : vector<1x8x8xi1> to vector<2x8x8xi1>
    %110 = vector.broadcast %cst_32 : f32 to vector<2x8x8xf32>
    %111 = arith.select %109, %107, %110 : vector<2x8x8xi1>, vector<2x8x8xf32>
    %cst_33 = arith.constant dense<0xFF800000> : vector<2x8xf32>
    %112 = vector.multi_reduction <maximumf>, %111, %cst_33 [2] : vector<2x8x8xf32> to vector<2x8xf32>
    %113 = vector.shape_cast %112 : vector<2x8xf32> to vector<2x8x1xf32>
    %114 = vector.broadcast %113 : vector<2x8x1xf32> to vector<2x8x8xf32>
    %115 = arith.subf %111, %114 : vector<2x8x8xf32>
    %116 = math.exp %115 : vector<2x8x8xf32>
    %cst_34 = arith.constant dense<0.000000e+00> : vector<2x8xf32>
    %117 = vector.multi_reduction <add>, %116, %cst_34 [2] : vector<2x8x8xf32> to vector<2x8xf32>
    %118 = vector.shape_cast %117 : vector<2x8xf32> to vector<2x8x1xf32>
    %119 = tpu.reciprocal %118 {approx = true} : vector<2x8x1xf32> -> vector<2x8x1xf32>
    %120 = vector.broadcast %119 : vector<2x8x1xf32> to vector<2x8x8xf32>
    %121 = arith.mulf %116, %120 : vector<2x8x8xf32>
    %122 = arith.truncf %121 : vector<2x8x8xf32> to vector<2x8x8xbf16>
    "tpu.trace_start"() <{level = 10 : i32, message = "bqk,bkd->bqd"}> : () -> ()
    %cst_35 = arith.constant dense<0.000000e+00> : vector<2x8x8xf32>
    %123 = tpu.matmul %122, %106, %cst_35 {dimension_numbers = #tpu.dot_dimension_numbers<[2], [1], [1], [2], [0, 0, 0, 1, 1, 2], [0], [0]>} : vector<2x8x8xbf16>, vector<2x8x8xbf16>, vector<2x8x8xf32> -> vector<2x8x8xf32>
    "tpu.trace_stop"() : () -> ()
    %124 = vector.shape_cast %123 : vector<2x8x8xf32> to vector<16x8xf32>
    %125 = vector.extract_strided_slice %37 {offsets = [0, 24], sizes = [16, 8], strides = [1, 1]} : vector<16x96xf32> to vector<16x8xf32>
    %cst_36 = arith.constant 0.353553385 : f32
    %126 = vector.broadcast %cst_36 : f32 to vector<16x8xf32>
    %127 = arith.mulf %125, %126 : vector<16x8xf32>
    %128 = vector.extract_strided_slice %37 {offsets = [0, 56], sizes = [16, 8], strides = [1, 1]} : vector<16x96xf32> to vector<16x8xf32>
    %129 = vector.extract_strided_slice %37 {offsets = [0, 88], sizes = [16, 8], strides = [1, 1]} : vector<16x96xf32> to vector<16x8xf32>
    %130 = vector.shape_cast %127 : vector<16x8xf32> to vector<2x8x8xf32>
    %131 = arith.truncf %130 : vector<2x8x8xf32> to vector<2x8x8xbf16>
    %132 = vector.shape_cast %128 : vector<16x8xf32> to vector<2x8x8xf32>
    %133 = arith.truncf %132 : vector<2x8x8xf32> to vector<2x8x8xbf16>
    %134 = vector.shape_cast %129 : vector<16x8xf32> to vector<2x8x8xf32>
    %135 = arith.truncf %134 : vector<2x8x8xf32> to vector<2x8x8xbf16>
    "tpu.trace_start"() <{level = 10 : i32, message = "bqd,bkd->bqk"}> : () -> ()
    %cst_37 = arith.constant dense<0.000000e+00> : vector<2x8x8xf32>
    %136 = tpu.matmul %131, %133, %cst_37 {dimension_numbers = #tpu.dot_dimension_numbers<[2], [2], [1], [1], [0, 0, 0, 1, 1, 1], [0], [0]>} : vector<2x8x8xbf16>, vector<2x8x8xbf16>, vector<2x8x8xf32> -> vector<2x8x8xf32>
    %cst_38 = arith.constant -1.000000e+30 : f32
    "tpu.trace_stop"() : () -> ()
    %137 = vector.shape_cast %3 : vector<1x8x8xi1> to vector<1x8x8xi1>
    %138 = vector.broadcast %137 : vector<1x8x8xi1> to vector<2x8x8xi1>
    %139 = vector.broadcast %cst_38 : f32 to vector<2x8x8xf32>
    %140 = arith.select %138, %136, %139 : vector<2x8x8xi1>, vector<2x8x8xf32>
    %cst_39 = arith.constant dense<0xFF800000> : vector<2x8xf32>
    %141 = vector.multi_reduction <maximumf>, %140, %cst_39 [2] : vector<2x8x8xf32> to vector<2x8xf32>
    %142 = vector.shape_cast %141 : vector<2x8xf32> to vector<2x8x1xf32>
    %143 = vector.broadcast %142 : vector<2x8x1xf32> to vector<2x8x8xf32>
    %144 = arith.subf %140, %143 : vector<2x8x8xf32>
    %145 = math.exp %144 : vector<2x8x8xf32>
    %cst_40 = arith.constant dense<0.000000e+00> : vector<2x8xf32>
    %146 = vector.multi_reduction <add>, %145, %cst_40 [2] : vector<2x8x8xf32> to vector<2x8xf32>
    %147 = vector.shape_cast %146 : vector<2x8xf32> to vector<2x8x1xf32>
    %148 = tpu.reciprocal %147 {approx = true} : vector<2x8x1xf32> -> vector<2x8x1xf32>
    %149 = vector.broadcast %148 : vector<2x8x1xf32> to vector<2x8x8xf32>
    %150 = arith.mulf %145, %149 : vector<2x8x8xf32>
    %151 = arith.truncf %150 : vector<2x8x8xf32> to vector<2x8x8xbf16>
    "tpu.trace_start"() <{level = 10 : i32, message = "bqk,bkd->bqd"}> : () -> ()
    %cst_41 = arith.constant dense<0.000000e+00> : vector<2x8x8xf32>
    %152 = tpu.matmul %151, %135, %cst_41 {dimension_numbers = #tpu.dot_dimension_numbers<[2], [1], [1], [2], [0, 0, 0, 1, 1, 2], [0], [0]>} : vector<2x8x8xbf16>, vector<2x8x8xbf16>, vector<2x8x8xf32> -> vector<2x8x8xf32>
    "tpu.trace_stop"() : () -> ()
    %153 = vector.shape_cast %152 : vector<2x8x8xf32> to vector<16x8xf32>
    %154 = tpu.concatenate %66, %95, %124, %153 in 1 : vector<16x8xf32>, vector<16x8xf32>, vector<16x8xf32>, vector<16x8xf32> -> vector<16x32xf32>
    %155 = arith.truncf %154 : vector<16x32xf32> to vector<16x32xbf16>
    %c0_42 = arith.constant 0 : index
    %c0_43 = arith.constant 0 : index
    %c0_44 = arith.constant 0 : index
    %156 = vector.load %arg7[%c0_42, %c0_43, %c0_44] : memref<2x32x32xbf16, #tpu.memory_space<vmem>>, vector<1x32x32xbf16>
    %157 = vector.shape_cast %156 : vector<1x32x32xbf16> to vector<32x32xbf16>
    %cst_45 = arith.constant dense<0.000000e+00> : vector<16x32xf32>
    %158 = tpu.matmul %155, %157, %cst_45 {dimension_numbers = #tpu.dot_dimension_numbers<[1], [0], [0], [1], [0, 0, 1, 1], [], []>} : vector<16x32xbf16>, vector<32x32xbf16>, vector<16x32xf32> -> vector<16x32xf32>
    %c0_46 = arith.constant 0 : index
    %c0_47 = arith.constant 0 : index
    %c0_48 = arith.constant 0 : index
    %159 = vector.load %arg8[%c0_46, %c0_47, %c0_48] : memref<2x1x32xf32, #tpu.memory_space<vmem>>, vector<1x1x32xf32>
    %160 = vector.shape_cast %159 : vector<1x1x32xf32> to vector<1x32xf32>
    %161 = vector.broadcast %160 : vector<1x32xf32> to vector<16x32xf32>
    %162 = arith.addf %158, %161 : vector<16x32xf32>
    %163 = arith.addf %0, %162 : vector<16x32xf32>
    %c0_49 = arith.constant 0 : index
    %c0_50 = arith.constant 0 : index
    %c0_51 = arith.constant 0 : index
    %164 = vector.load %arg9[%c0_49, %c0_50, %c0_51] : memref<2x1x32xf32, #tpu.memory_space<vmem>>, vector<1x1x32xf32>
    %165 = vector.shape_cast %164 : vector<1x1x32xf32> to vector<1x32xf32>
    %c0_52 = arith.constant 0 : index
    %c0_53 = arith.constant 0 : index
    %c0_54 = arith.constant 0 : index
    %166 = vector.load %arg10[%c0_52, %c0_53, %c0_54] : memref<2x1x32xf32, #tpu.memory_space<vmem>>, vector<1x1x32xf32>
    %167 = vector.shape_cast %166 : vector<1x1x32xf32> to vector<1x32xf32>
    %cst_55 = arith.constant dense<0.000000e+00> : vector<16xf32>
    %168 = vector.multi_reduction <add>, %163, %cst_55 [1] : vector<16x32xf32> to vector<16xf32>
    %169 = vector.shape_cast %168 : vector<16xf32> to vector<16x1xf32>
    %cst_56 = arith.constant 3.200000e+01 : f32
    %170 = vector.broadcast %cst_56 : f32 to vector<16x1xf32>
    %171 = arith.divf %169, %170 : vector<16x1xf32>
    %172 = vector.broadcast %171 : vector<16x1xf32> to vector<16x32xf32>
    %173 = arith.subf %163, %172 : vector<16x32xf32>
    %174 = arith.mulf %173, %173 : vector<16x32xf32>
    %cst_57 = arith.constant dense<0.000000e+00> : vector<16xf32>
    %175 = vector.multi_reduction <add>, %174, %cst_57 [1] : vector<16x32xf32> to vector<16xf32>
    %176 = vector.shape_cast %175 : vector<16xf32> to vector<16x1xf32>
    %cst_58 = arith.constant 3.200000e+01 : f32
    %177 = vector.broadcast %cst_58 : f32 to vector<16x1xf32>
    %178 = arith.divf %176, %177 : vector<16x1xf32>
    %179 = vector.broadcast %171 : vector<16x1xf32> to vector<16x32xf32>
    %180 = arith.subf %163, %179 : vector<16x32xf32>
    %cst_59 = arith.constant 9.99999974E-6 : f32
    %181 = vector.broadcast %cst_59 : f32 to vector<16x1xf32>
    %182 = arith.addf %178, %181 : vector<16x1xf32>
    %183 = math.rsqrt %182 : vector<16x1xf32>
    %184 = vector.broadcast %183 : vector<16x1xf32> to vector<16x32xf32>
    %185 = arith.mulf %180, %184 : vector<16x32xf32>
    %186 = vector.broadcast %165 : vector<1x32xf32> to vector<16x32xf32>
    %187 = arith.mulf %185, %186 : vector<16x32xf32>
    %188 = vector.broadcast %167 : vector<1x32xf32> to vector<16x32xf32>
    %189 = arith.addf %187, %188 : vector<16x32xf32>
    %190 = arith.truncf %189 : vector<16x32xf32> to vector<16x32xbf16>
    %c0_60 = arith.constant 0 : index
    %c0_61 = arith.constant 0 : index
    %c0_62 = arith.constant 0 : index
    %191 = vector.load %arg11[%c0_60, %c0_61, %c0_62] : memref<2x32x128xbf16, #tpu.memory_space<vmem>>, vector<1x32x128xbf16>
    %192 = vector.shape_cast %191 : vector<1x32x128xbf16> to vector<32x128xbf16>
    %cst_63 = arith.constant dense<0.000000e+00> : vector<16x128xf32>
    %193 = tpu.matmul %190, %192, %cst_63 {dimension_numbers = #tpu.dot_dimension_numbers<[1], [0], [0], [1], [0, 0, 1, 1], [], []>} : vector<16x32xbf16>, vector<32x128xbf16>, vector<16x128xf32> -> vector<16x128xf32>
    %c0_64 = arith.constant 0 : index
    %c0_65 = arith.constant 0 : index
    %c0_66 = arith.constant 0 : index
    %194 = vector.load %arg12[%c0_64, %c0_65, %c0_66] : memref<2x1x128xf32, #tpu.memory_space<vmem>>, vector<1x1x128xf32>
    %195 = vector.shape_cast %194 : vector<1x1x128xf32> to vector<1x128xf32>
    %196 = vector.broadcast %195 : vector<1x128xf32> to vector<16x128xf32>
    %197 = arith.addf %193, %196 : vector<16x128xf32>
    %cst_67 = arith.constant 1.702000e+00 : f32
    %198 = vector.broadcast %cst_67 : f32 to vector<16x128xf32>
    %199 = arith.mulf %198, %197 : vector<16x128xf32>
    %200 = arith.negf %199 : vector<16x128xf32>
    %201 = math.exp %200 : vector<16x128xf32>
    %cst_68 = arith.constant 1.000000e+00 : f32
    %202 = vector.broadcast %cst_68 : f32 to vector<16x128xf32>
    %203 = arith.addf %202, %201 : vector<16x128xf32>
    %204 = arith.divf %202, %203 : vector<16x128xf32>
    %205 = arith.mulf %197, %204 : vector<16x128xf32>
    %206 = arith.truncf %205 : vector<16x128xf32> to vector<16x128xbf16>
    %c0_69 = arith.constant 0 : index
    %c0_70 = arith.constant 0 : index
    %c0_71 = arith.constant 0 : index
    %207 = vector.load %arg13[%c0_69, %c0_70, %c0_71] : memref<2x128x32xbf16, #tpu.memory_space<vmem>>, vector<1x128x32xbf16>
    %208 = vector.shape_cast %207 : vector<1x128x32xbf16> to vector<128x32xbf16>
    %cst_72 = arith.constant dense<0.000000e+00> : vector<16x32xf32>
    %209 = tpu.matmul %206, %208, %cst_72 {dimension_numbers = #tpu.dot_dimension_numbers<[1], [0], [0], [1], [0, 0, 1, 1], [], []>} : vector<16x128xbf16>, vector<128x32xbf16>, vector<16x32xf32> -> vector<16x32xf32>
    %c0_73 = arith.constant 0 : index
    %c0_74 = arith.constant 0 : index
    %c0_75 = arith.constant 0 : index
    %210 = vector.load %arg14[%c0_73, %c0_74, %c0_75] : memref<2x1x32xf32, #tpu.memory_space<vmem>>, vector<1x1x32xf32>
    %211 = vector.shape_cast %210 : vector<1x1x32xf32> to vector<1x32xf32>
    %212 = vector.broadcast %211 : vector<1x32xf32> to vector<16x32xf32>
    %213 = arith.addf %209, %212 : vector<16x32xf32>
    %214 = arith.addf %163, %213 : vector<16x32xf32>
    %c1 = arith.constant 1 : index
    %c0_76 = arith.constant 0 : index
    %c0_77 = arith.constant 0 : index
    %215 = vector.load %arg3[%c1, %c0_76, %c0_77] : memref<2x1x32xf32, #tpu.memory_space<vmem>>, vector<1x1x32xf32>
    %216 = vector.shape_cast %215 : vector<1x1x32xf32> to vector<1x32xf32>
    %c1_78 = arith.constant 1 : index
    %c0_79 = arith.constant 0 : index
    %c0_80 = arith.constant 0 : index
    %217 = vector.load %arg4[%c1_78, %c0_79, %c0_80] : memref<2x1x32xf32, #tpu.memory_space<vmem>>, vector<1x1x32xf32>
    %218 = vector.shape_cast %217 : vector<1x1x32xf32> to vector<1x32xf32>
    %cst_81 = arith.constant dense<0.000000e+00> : vector<16xf32>
    %219 = vector.multi_reduction <add>, %214, %cst_81 [1] : vector<16x32xf32> to vector<16xf32>
    %220 = vector.shape_cast %219 : vector<16xf32> to vector<16x1xf32>
    %cst_82 = arith.constant 3.200000e+01 : f32
    %221 = vector.broadcast %cst_82 : f32 to vector<16x1xf32>
    %222 = arith.divf %220, %221 : vector<16x1xf32>
    %223 = vector.broadcast %222 : vector<16x1xf32> to vector<16x32xf32>
    %224 = arith.subf %214, %223 : vector<16x32xf32>
    %225 = arith.mulf %224, %224 : vector<16x32xf32>
    %cst_83 = arith.constant dense<0.000000e+00> : vector<16xf32>
    %226 = vector.multi_reduction <add>, %225, %cst_83 [1] : vector<16x32xf32> to vector<16xf32>
    %227 = vector.shape_cast %226 : vector<16xf32> to vector<16x1xf32>
    %cst_84 = arith.constant 3.200000e+01 : f32
    %228 = vector.broadcast %cst_84 : f32 to vector<16x1xf32>
    %229 = arith.divf %227, %228 : vector<16x1xf32>
    %230 = vector.broadcast %222 : vector<16x1xf32> to vector<16x32xf32>
    %231 = arith.subf %214, %230 : vector<16x32xf32>
    %cst_85 = arith.constant 9.99999974E-6 : f32
    %232 = vector.broadcast %cst_85 : f32 to vector<16x1xf32>
    %233 = arith.addf %229, %232 : vector<16x1xf32>
    %234 = math.rsqrt %233 : vector<16x1xf32>
    %235 = vector.broadcast %234 : vector<16x1xf32> to vector<16x32xf32>
    %236 = arith.mulf %231, %235 : vector<16x32xf32>
    %237 = vector.broadcast %216 : vector<1x32xf32> to vector<16x32xf32>
    %238 = arith.mulf %236, %237 : vector<16x32xf32>
    %239 = vector.broadcast %218 : vector<1x32xf32> to vector<16x32xf32>
    %240 = arith.addf %238, %239 : vector<16x32xf32>
    %241 = arith.truncf %240 : vector<16x32xf32> to vector<16x32xbf16>
    %c1_86 = arith.constant 1 : index
    %c0_87 = arith.constant 0 : index
    %c0_88 = arith.constant 0 : index
    %242 = vector.load %arg5[%c1_86, %c0_87, %c0_88] : memref<2x32x96xbf16, #tpu.memory_space<vmem>>, vector<1x32x96xbf16>
    %243 = vector.shape_cast %242 : vector<1x32x96xbf16> to vector<32x96xbf16>
    %cst_89 = arith.constant dense<0.000000e+00> : vector<16x96xf32>
    %244 = tpu.matmul %241, %243, %cst_89 {dimension_numbers = #tpu.dot_dimension_numbers<[1], [0], [0], [1], [0, 0, 1, 1], [], []>} : vector<16x32xbf16>, vector<32x96xbf16>, vector<16x96xf32> -> vector<16x96xf32>
    %c1_90 = arith.constant 1 : index
    %c0_91 = arith.constant 0 : index
    %c0_92 = arith.constant 0 : index
    %245 = vector.load %arg6[%c1_90, %c0_91, %c0_92] : memref<2x1x96xf32, #tpu.memory_space<vmem>>, vector<1x1x96xf32>
    %246 = vector.shape_cast %245 : vector<1x1x96xf32> to vector<1x96xf32>
    %247 = vector.broadcast %246 : vector<1x96xf32> to vector<16x96xf32>
    %248 = arith.addf %244, %247 : vector<16x96xf32>
    %249 = vector.extract_strided_slice %248 {offsets = [0, 0], sizes = [16, 8], strides = [1, 1]} : vector<16x96xf32> to vector<16x8xf32>
    %cst_93 = arith.constant 0.353553385 : f32
    %250 = vector.broadcast %cst_93 : f32 to vector<16x8xf32>
    %251 = arith.mulf %249, %250 : vector<16x8xf32>
    %252 = vector.extract_strided_slice %248 {offsets = [0, 32], sizes = [16, 8], strides = [1, 1]} : vector<16x96xf32> to vector<16x8xf32>
    %253 = vector.extract_strided_slice %248 {offsets = [0, 64], sizes = [16, 8], strides = [1, 1]} : vector<16x96xf32> to vector<16x8xf32>
    %254 = vector.shape_cast %251 : vector<16x8xf32> to vector<2x8x8xf32>
    %255 = arith.truncf %254 : vector<2x8x8xf32> to vector<2x8x8xbf16>
    %256 = vector.shape_cast %252 : vector<16x8xf32> to vector<2x8x8xf32>
    %257 = arith.truncf %256 : vector<2x8x8xf32> to vector<2x8x8xbf16>
    %258 = vector.shape_cast %253 : vector<16x8xf32> to vector<2x8x8xf32>
    %259 = arith.truncf %258 : vector<2x8x8xf32> to vector<2x8x8xbf16>
    "tpu.trace_start"() <{level = 10 : i32, message = "bqd,bkd->bqk"}> : () -> ()
    %cst_94 = arith.constant dense<0.000000e+00> : vector<2x8x8xf32>
    %260 = tpu.matmul %255, %257, %cst_94 {dimension_numbers = #tpu.dot_dimension_numbers<[2], [2], [1], [1], [0, 0, 0, 1, 1, 1], [0], [0]>} : vector<2x8x8xbf16>, vector<2x8x8xbf16>, vector<2x8x8xf32> -> vector<2x8x8xf32>
    %cst_95 = arith.constant -1.000000e+30 : f32
    "tpu.trace_stop"() : () -> ()
    %261 = vector.shape_cast %3 : vector<1x8x8xi1> to vector<1x8x8xi1>
    %262 = vector.broadcast %261 : vector<1x8x8xi1> to vector<2x8x8xi1>
    %263 = vector.broadcast %cst_95 : f32 to vector<2x8x8xf32>
    %264 = arith.select %262, %260, %263 : vector<2x8x8xi1>, vector<2x8x8xf32>
    %cst_96 = arith.constant dense<0xFF800000> : vector<2x8xf32>
    %265 = vector.multi_reduction <maximumf>, %264, %cst_96 [2] : vector<2x8x8xf32> to vector<2x8xf32>
    %266 = vector.shape_cast %265 : vector<2x8xf32> to vector<2x8x1xf32>
    %267 = vector.broadcast %266 : vector<2x8x1xf32> to vector<2x8x8xf32>
    %268 = arith.subf %264, %267 : vector<2x8x8xf32>
    %269 = math.exp %268 : vector<2x8x8xf32>
    %cst_97 = arith.constant dense<0.000000e+00> : vector<2x8xf32>
    %270 = vector.multi_reduction <add>, %269, %cst_97 [2] : vector<2x8x8xf32> to vector<2x8xf32>
    %271 = vector.shape_cast %270 : vector<2x8xf32> to vector<2x8x1xf32>
    %272 = tpu.reciprocal %271 {approx = true} : vector<2x8x1xf32> -> vector<2x8x1xf32>
    %273 = vector.broadcast %272 : vector<2x8x1xf32> to vector<2x8x8xf32>
    %274 = arith.mulf %269, %273 : vector<2x8x8xf32>
    %275 = arith.truncf %274 : vector<2x8x8xf32> to vector<2x8x8xbf16>
    "tpu.trace_start"() <{level = 10 : i32, message = "bqk,bkd->bqd"}> : () -> ()
    %cst_98 = arith.constant dense<0.000000e+00> : vector<2x8x8xf32>
    %276 = tpu.matmul %275, %259, %cst_98 {dimension_numbers = #tpu.dot_dimension_numbers<[2], [1], [1], [2], [0, 0, 0, 1, 1, 2], [0], [0]>} : vector<2x8x8xbf16>, vector<2x8x8xbf16>, vector<2x8x8xf32> -> vector<2x8x8xf32>
    "tpu.trace_stop"() : () -> ()
    %277 = vector.shape_cast %276 : vector<2x8x8xf32> to vector<16x8xf32>
    %278 = vector.extract_strided_slice %248 {offsets = [0, 8], sizes = [16, 8], strides = [1, 1]} : vector<16x96xf32> to vector<16x8xf32>
    %cst_99 = arith.constant 0.353553385 : f32
    %279 = vector.broadcast %cst_99 : f32 to vector<16x8xf32>
    %280 = arith.mulf %278, %279 : vector<16x8xf32>
    %281 = vector.extract_strided_slice %248 {offsets = [0, 40], sizes = [16, 8], strides = [1, 1]} : vector<16x96xf32> to vector<16x8xf32>
    %282 = vector.extract_strided_slice %248 {offsets = [0, 72], sizes = [16, 8], strides = [1, 1]} : vector<16x96xf32> to vector<16x8xf32>
    %283 = vector.shape_cast %280 : vector<16x8xf32> to vector<2x8x8xf32>
    %284 = arith.truncf %283 : vector<2x8x8xf32> to vector<2x8x8xbf16>
    %285 = vector.shape_cast %281 : vector<16x8xf32> to vector<2x8x8xf32>
    %286 = arith.truncf %285 : vector<2x8x8xf32> to vector<2x8x8xbf16>
    %287 = vector.shape_cast %282 : vector<16x8xf32> to vector<2x8x8xf32>
    %288 = arith.truncf %287 : vector<2x8x8xf32> to vector<2x8x8xbf16>
    "tpu.trace_start"() <{level = 10 : i32, message = "bqd,bkd->bqk"}> : () -> ()
    %cst_100 = arith.constant dense<0.000000e+00> : vector<2x8x8xf32>
    %289 = tpu.matmul %284, %286, %cst_100 {dimension_numbers = #tpu.dot_dimension_numbers<[2], [2], [1], [1], [0, 0, 0, 1, 1, 1], [0], [0]>} : vector<2x8x8xbf16>, vector<2x8x8xbf16>, vector<2x8x8xf32> -> vector<2x8x8xf32>
    %cst_101 = arith.constant -1.000000e+30 : f32
    "tpu.trace_stop"() : () -> ()
    %290 = vector.shape_cast %3 : vector<1x8x8xi1> to vector<1x8x8xi1>
    %291 = vector.broadcast %290 : vector<1x8x8xi1> to vector<2x8x8xi1>
    %292 = vector.broadcast %cst_101 : f32 to vector<2x8x8xf32>
    %293 = arith.select %291, %289, %292 : vector<2x8x8xi1>, vector<2x8x8xf32>
    %cst_102 = arith.constant dense<0xFF800000> : vector<2x8xf32>
    %294 = vector.multi_reduction <maximumf>, %293, %cst_102 [2] : vector<2x8x8xf32> to vector<2x8xf32>
    %295 = vector.shape_cast %294 : vector<2x8xf32> to vector<2x8x1xf32>
    %296 = vector.broadcast %295 : vector<2x8x1xf32> to vector<2x8x8xf32>
    %297 = arith.subf %293, %296 : vector<2x8x8xf32>
    %298 = math.exp %297 : vector<2x8x8xf32>
    %cst_103 = arith.constant dense<0.000000e+00> : vector<2x8xf32>
    %299 = vector.multi_reduction <add>, %298, %cst_103 [2] : vector<2x8x8xf32> to vector<2x8xf32>
    %300 = vector.shape_cast %299 : vector<2x8xf32> to vector<2x8x1xf32>
    %301 = tpu.reciprocal %300 {approx = true} : vector<2x8x1xf32> -> vector<2x8x1xf32>
    %302 = vector.broadcast %301 : vector<2x8x1xf32> to vector<2x8x8xf32>
    %303 = arith.mulf %298, %302 : vector<2x8x8xf32>
    %304 = arith.truncf %303 : vector<2x8x8xf32> to vector<2x8x8xbf16>
    "tpu.trace_start"() <{level = 10 : i32, message = "bqk,bkd->bqd"}> : () -> ()
    %cst_104 = arith.constant dense<0.000000e+00> : vector<2x8x8xf32>
    %305 = tpu.matmul %304, %288, %cst_104 {dimension_numbers = #tpu.dot_dimension_numbers<[2], [1], [1], [2], [0, 0, 0, 1, 1, 2], [0], [0]>} : vector<2x8x8xbf16>, vector<2x8x8xbf16>, vector<2x8x8xf32> -> vector<2x8x8xf32>
    "tpu.trace_stop"() : () -> ()
    %306 = vector.shape_cast %305 : vector<2x8x8xf32> to vector<16x8xf32>
    %307 = vector.extract_strided_slice %248 {offsets = [0, 16], sizes = [16, 8], strides = [1, 1]} : vector<16x96xf32> to vector<16x8xf32>
    %cst_105 = arith.constant 0.353553385 : f32
    %308 = vector.broadcast %cst_105 : f32 to vector<16x8xf32>
    %309 = arith.mulf %307, %308 : vector<16x8xf32>
    %310 = vector.extract_strided_slice %248 {offsets = [0, 48], sizes = [16, 8], strides = [1, 1]} : vector<16x96xf32> to vector<16x8xf32>
    %311 = vector.extract_strided_slice %248 {offsets = [0, 80], sizes = [16, 8], strides = [1, 1]} : vector<16x96xf32> to vector<16x8xf32>
    %312 = vector.shape_cast %309 : vector<16x8xf32> to vector<2x8x8xf32>
    %313 = arith.truncf %312 : vector<2x8x8xf32> to vector<2x8x8xbf16>
    %314 = vector.shape_cast %310 : vector<16x8xf32> to vector<2x8x8xf32>
    %315 = arith.truncf %314 : vector<2x8x8xf32> to vector<2x8x8xbf16>
    %316 = vector.shape_cast %311 : vector<16x8xf32> to vector<2x8x8xf32>
    %317 = arith.truncf %316 : vector<2x8x8xf32> to vector<2x8x8xbf16>
    "tpu.trace_start"() <{level = 10 : i32, message = "bqd,bkd->bqk"}> : () -> ()
    %cst_106 = arith.constant dense<0.000000e+00> : vector<2x8x8xf32>
    %318 = tpu.matmul %313, %315, %cst_106 {dimension_numbers = #tpu.dot_dimension_numbers<[2], [2], [1], [1], [0, 0, 0, 1, 1, 1], [0], [0]>} : vector<2x8x8xbf16>, vector<2x8x8xbf16>, vector<2x8x8xf32> -> vector<2x8x8xf32>
    %cst_107 = arith.constant -1.000000e+30 : f32
    "tpu.trace_stop"() : () -> ()
    %319 = vector.shape_cast %3 : vector<1x8x8xi1> to vector<1x8x8xi1>
    %320 = vector.broadcast %319 : vector<1x8x8xi1> to vector<2x8x8xi1>
    %321 = vector.broadcast %cst_107 : f32 to vector<2x8x8xf32>
    %322 = arith.select %320, %318, %321 : vector<2x8x8xi1>, vector<2x8x8xf32>
    %cst_108 = arith.constant dense<0xFF800000> : vector<2x8xf32>
    %323 = vector.multi_reduction <maximumf>, %322, %cst_108 [2] : vector<2x8x8xf32> to vector<2x8xf32>
    %324 = vector.shape_cast %323 : vector<2x8xf32> to vector<2x8x1xf32>
    %325 = vector.broadcast %324 : vector<2x8x1xf32> to vector<2x8x8xf32>
    %326 = arith.subf %322, %325 : vector<2x8x8xf32>
    %327 = math.exp %326 : vector<2x8x8xf32>
    %cst_109 = arith.constant dense<0.000000e+00> : vector<2x8xf32>
    %328 = vector.multi_reduction <add>, %327, %cst_109 [2] : vector<2x8x8xf32> to vector<2x8xf32>
    %329 = vector.shape_cast %328 : vector<2x8xf32> to vector<2x8x1xf32>
    %330 = tpu.reciprocal %329 {approx = true} : vector<2x8x1xf32> -> vector<2x8x1xf32>
    %331 = vector.broadcast %330 : vector<2x8x1xf32> to vector<2x8x8xf32>
    %332 = arith.mulf %327, %331 : vector<2x8x8xf32>
    %333 = arith.truncf %332 : vector<2x8x8xf32> to vector<2x8x8xbf16>
    "tpu.trace_start"() <{level = 10 : i32, message = "bqk,bkd->bqd"}> : () -> ()
    %cst_110 = arith.constant dense<0.000000e+00> : vector<2x8x8xf32>
    %334 = tpu.matmul %333, %317, %cst_110 {dimension_numbers = #tpu.dot_dimension_numbers<[2], [1], [1], [2], [0, 0, 0, 1, 1, 2], [0], [0]>} : vector<2x8x8xbf16>, vector<2x8x8xbf16>, vector<2x8x8xf32> -> vector<2x8x8xf32>
    "tpu.trace_stop"() : () -> ()
    %335 = vector.shape_cast %334 : vector<2x8x8xf32> to vector<16x8xf32>
    %336 = vector.extract_strided_slice %248 {offsets = [0, 24], sizes = [16, 8], strides = [1, 1]} : vector<16x96xf32> to vector<16x8xf32>
    %cst_111 = arith.constant 0.353553385 : f32
    %337 = vector.broadcast %cst_111 : f32 to vector<16x8xf32>
    %338 = arith.mulf %336, %337 : vector<16x8xf32>
    %339 = vector.extract_strided_slice %248 {offsets = [0, 56], sizes = [16, 8], strides = [1, 1]} : vector<16x96xf32> to vector<16x8xf32>
    %340 = vector.extract_strided_slice %248 {offsets = [0, 88], sizes = [16, 8], strides = [1, 1]} : vector<16x96xf32> to vector<16x8xf32>
    %341 = vector.shape_cast %338 : vector<16x8xf32> to vector<2x8x8xf32>
    %342 = arith.truncf %341 : vector<2x8x8xf32> to vector<2x8x8xbf16>
    %343 = vector.shape_cast %339 : vector<16x8xf32> to vector<2x8x8xf32>
    %344 = arith.truncf %343 : vector<2x8x8xf32> to vector<2x8x8xbf16>
    %345 = vector.shape_cast %340 : vector<16x8xf32> to vector<2x8x8xf32>
    %346 = arith.truncf %345 : vector<2x8x8xf32> to vector<2x8x8xbf16>
    "tpu.trace_start"() <{level = 10 : i32, message = "bqd,bkd->bqk"}> : () -> ()
    %cst_112 = arith.constant dense<0.000000e+00> : vector<2x8x8xf32>
    %347 = tpu.matmul %342, %344, %cst_112 {dimension_numbers = #tpu.dot_dimension_numbers<[2], [2], [1], [1], [0, 0, 0, 1, 1, 1], [0], [0]>} : vector<2x8x8xbf16>, vector<2x8x8xbf16>, vector<2x8x8xf32> -> vector<2x8x8xf32>
    %cst_113 = arith.constant -1.000000e+30 : f32
    "tpu.trace_stop"() : () -> ()
    %348 = vector.shape_cast %3 : vector<1x8x8xi1> to vector<1x8x8xi1>
    %349 = vector.broadcast %348 : vector<1x8x8xi1> to vector<2x8x8xi1>
    %350 = vector.broadcast %cst_113 : f32 to vector<2x8x8xf32>
    %351 = arith.select %349, %347, %350 : vector<2x8x8xi1>, vector<2x8x8xf32>
    %cst_114 = arith.constant dense<0xFF800000> : vector<2x8xf32>
    %352 = vector.multi_reduction <maximumf>, %351, %cst_114 [2] : vector<2x8x8xf32> to vector<2x8xf32>
    %353 = vector.shape_cast %352 : vector<2x8xf32> to vector<2x8x1xf32>
    %354 = vector.broadcast %353 : vector<2x8x1xf32> to vector<2x8x8xf32>
    %355 = arith.subf %351, %354 : vector<2x8x8xf32>
    %356 = math.exp %355 : vector<2x8x8xf32>
    %cst_115 = arith.constant dense<0.000000e+00> : vector<2x8xf32>
    %357 = vector.multi_reduction <add>, %356, %cst_115 [2] : vector<2x8x8xf32> to vector<2x8xf32>
    %358 = vector.shape_cast %357 : vector<2x8xf32> to vector<2x8x1xf32>
    %359 = tpu.reciprocal %358 {approx = true} : vector<2x8x1xf32> -> vector<2x8x1xf32>
    %360 = vector.broadcast %359 : vector<2x8x1xf32> to vector<2x8x8xf32>
    %361 = arith.mulf %356, %360 : vector<2x8x8xf32>
    %362 = arith.truncf %361 : vector<2x8x8xf32> to vector<2x8x8xbf16>
    "tpu.trace_start"() <{level = 10 : i32, message = "bqk,bkd->bqd"}> : () -> ()
    %cst_116 = arith.constant dense<0.000000e+00> : vector<2x8x8xf32>
    %363 = tpu.matmul %362, %346, %cst_116 {dimension_numbers = #tpu.dot_dimension_numbers<[2], [1], [1], [2], [0, 0, 0, 1, 1, 2], [0], [0]>} : vector<2x8x8xbf16>, vector<2x8x8xbf16>, vector<2x8x8xf32> -> vector<2x8x8xf32>
    "tpu.trace_stop"() : () -> ()
    %364 = vector.shape_cast %363 : vector<2x8x8xf32> to vector<16x8xf32>
    %365 = tpu.concatenate %277, %306, %335, %364 in 1 : vector<16x8xf32>, vector<16x8xf32>, vector<16x8xf32>, vector<16x8xf32> -> vector<16x32xf32>
    %366 = arith.truncf %365 : vector<16x32xf32> to vector<16x32xbf16>
    %c1_117 = arith.constant 1 : index
    %c0_118 = arith.constant 0 : index
    %c0_119 = arith.constant 0 : index
    %367 = vector.load %arg7[%c1_117, %c0_118, %c0_119] : memref<2x32x32xbf16, #tpu.memory_space<vmem>>, vector<1x32x32xbf16>
    %368 = vector.shape_cast %367 : vector<1x32x32xbf16> to vector<32x32xbf16>
    %cst_120 = arith.constant dense<0.000000e+00> : vector<16x32xf32>
    %369 = tpu.matmul %366, %368, %cst_120 {dimension_numbers = #tpu.dot_dimension_numbers<[1], [0], [0], [1], [0, 0, 1, 1], [], []>} : vector<16x32xbf16>, vector<32x32xbf16>, vector<16x32xf32> -> vector<16x32xf32>
    %c1_121 = arith.constant 1 : index
    %c0_122 = arith.constant 0 : index
    %c0_123 = arith.constant 0 : index
    %370 = vector.load %arg8[%c1_121, %c0_122, %c0_123] : memref<2x1x32xf32, #tpu.memory_space<vmem>>, vector<1x1x32xf32>
    %371 = vector.shape_cast %370 : vector<1x1x32xf32> to vector<1x32xf32>
    %372 = vector.broadcast %371 : vector<1x32xf32> to vector<16x32xf32>
    %373 = arith.addf %369, %372 : vector<16x32xf32>
    %374 = arith.addf %214, %373 : vector<16x32xf32>
    %c1_124 = arith.constant 1 : index
    %c0_125 = arith.constant 0 : index
    %c0_126 = arith.constant 0 : index
    %375 = vector.load %arg9[%c1_124, %c0_125, %c0_126] : memref<2x1x32xf32, #tpu.memory_space<vmem>>, vector<1x1x32xf32>
    %376 = vector.shape_cast %375 : vector<1x1x32xf32> to vector<1x32xf32>
    %c1_127 = arith.constant 1 : index
    %c0_128 = arith.constant 0 : index
    %c0_129 = arith.constant 0 : index
    %377 = vector.load %arg10[%c1_127, %c0_128, %c0_129] : memref<2x1x32xf32, #tpu.memory_space<vmem>>, vector<1x1x32xf32>
    %378 = vector.shape_cast %377 : vector<1x1x32xf32> to vector<1x32xf32>
    %cst_130 = arith.constant dense<0.000000e+00> : vector<16xf32>
    %379 = vector.multi_reduction <add>, %374, %cst_130 [1] : vector<16x32xf32> to vector<16xf32>
    %380 = vector.shape_cast %379 : vector<16xf32> to vector<16x1xf32>
    %cst_131 = arith.constant 3.200000e+01 : f32
    %381 = vector.broadcast %cst_131 : f32 to vector<16x1xf32>
    %382 = arith.divf %380, %381 : vector<16x1xf32>
    %383 = vector.broadcast %382 : vector<16x1xf32> to vector<16x32xf32>
    %384 = arith.subf %374, %383 : vector<16x32xf32>
    %385 = arith.mulf %384, %384 : vector<16x32xf32>
    %cst_132 = arith.constant dense<0.000000e+00> : vector<16xf32>
    %386 = vector.multi_reduction <add>, %385, %cst_132 [1] : vector<16x32xf32> to vector<16xf32>
    %387 = vector.shape_cast %386 : vector<16xf32> to vector<16x1xf32>
    %cst_133 = arith.constant 3.200000e+01 : f32
    %388 = vector.broadcast %cst_133 : f32 to vector<16x1xf32>
    %389 = arith.divf %387, %388 : vector<16x1xf32>
    %390 = vector.broadcast %382 : vector<16x1xf32> to vector<16x32xf32>
    %391 = arith.subf %374, %390 : vector<16x32xf32>
    %cst_134 = arith.constant 9.99999974E-6 : f32
    %392 = vector.broadcast %cst_134 : f32 to vector<16x1xf32>
    %393 = arith.addf %389, %392 : vector<16x1xf32>
    %394 = math.rsqrt %393 : vector<16x1xf32>
    %395 = vector.broadcast %394 : vector<16x1xf32> to vector<16x32xf32>
    %396 = arith.mulf %391, %395 : vector<16x32xf32>
    %397 = vector.broadcast %376 : vector<1x32xf32> to vector<16x32xf32>
    %398 = arith.mulf %396, %397 : vector<16x32xf32>
    %399 = vector.broadcast %378 : vector<1x32xf32> to vector<16x32xf32>
    %400 = arith.addf %398, %399 : vector<16x32xf32>
    %401 = arith.truncf %400 : vector<16x32xf32> to vector<16x32xbf16>
    %c1_135 = arith.constant 1 : index
    %c0_136 = arith.constant 0 : index
    %c0_137 = arith.constant 0 : index
    %402 = vector.load %arg11[%c1_135, %c0_136, %c0_137] : memref<2x32x128xbf16, #tpu.memory_space<vmem>>, vector<1x32x128xbf16>
    %403 = vector.shape_cast %402 : vector<1x32x128xbf16> to vector<32x128xbf16>
    %cst_138 = arith.constant dense<0.000000e+00> : vector<16x128xf32>
    %404 = tpu.matmul %401, %403, %cst_138 {dimension_numbers = #tpu.dot_dimension_numbers<[1], [0], [0], [1], [0, 0, 1, 1], [], []>} : vector<16x32xbf16>, vector<32x128xbf16>, vector<16x128xf32> -> vector<16x128xf32>
    %c1_139 = arith.constant 1 : index
    %c0_140 = arith.constant 0 : index
    %c0_141 = arith.constant 0 : index
    %405 = vector.load %arg12[%c1_139, %c0_140, %c0_141] : memref<2x1x128xf32, #tpu.memory_space<vmem>>, vector<1x1x128xf32>
    %406 = vector.shape_cast %405 : vector<1x1x128xf32> to vector<1x128xf32>
    %407 = vector.broadcast %406 : vector<1x128xf32> to vector<16x128xf32>
    %408 = arith.addf %404, %407 : vector<16x128xf32>
    %cst_142 = arith.constant 1.702000e+00 : f32
    %409 = vector.broadcast %cst_142 : f32 to vector<16x128xf32>
    %410 = arith.mulf %409, %408 : vector<16x128xf32>
    %411 = arith.negf %410 : vector<16x128xf32>
    %412 = math.exp %411 : vector<16x128xf32>
    %cst_143 = arith.constant 1.000000e+00 : f32
    %413 = vector.broadcast %cst_143 : f32 to vector<16x128xf32>
    %414 = arith.addf %413, %412 : vector<16x128xf32>
    %415 = arith.divf %413, %414 : vector<16x128xf32>
    %416 = arith.mulf %408, %415 : vector<16x128xf32>
    %417 = arith.truncf %416 : vector<16x128xf32> to vector<16x128xbf16>
    %c1_144 = arith.constant 1 : index
    %c0_145 = arith.constant 0 : index
    %c0_146 = arith.constant 0 : index
    %418 = vector.load %arg13[%c1_144, %c0_145, %c0_146] : memref<2x128x32xbf16, #tpu.memory_space<vmem>>, vector<1x128x32xbf16>
    %419 = vector.shape_cast %418 : vector<1x128x32xbf16> to vector<128x32xbf16>
    %cst_147 = arith.constant dense<0.000000e+00> : vector<16x32xf32>
    %420 = tpu.matmul %417, %419, %cst_147 {dimension_numbers = #tpu.dot_dimension_numbers<[1], [0], [0], [1], [0, 0, 1, 1], [], []>} : vector<16x128xbf16>, vector<128x32xbf16>, vector<16x32xf32> -> vector<16x32xf32>
    %c1_148 = arith.constant 1 : index
    %c0_149 = arith.constant 0 : index
    %c0_150 = arith.constant 0 : index
    %421 = vector.load %arg14[%c1_148, %c0_149, %c0_150] : memref<2x1x32xf32, #tpu.memory_space<vmem>>, vector<1x1x32xf32>
    %422 = vector.shape_cast %421 : vector<1x1x32xf32> to vector<1x32xf32>
    %423 = vector.broadcast %422 : vector<1x32xf32> to vector<16x32xf32>
    %424 = arith.addf %420, %423 : vector<16x32xf32>
    %425 = arith.addf %374, %424 : vector<16x32xf32>
    %426 = tpu.iota {dimensions = array<i32: 0>} : vector<2x16xi32>
    %427 = tpu.iota {dimensions = array<i32: 1>} : vector<2x16xi32>
    %c0_i32 = arith.constant 0 : i32
    %428 = vector.broadcast %c0_i32 : i32 to vector<2x16xi32>
    %429 = arith.cmpi eq, %426, %428 : vector<2x16xi32>
    %c0_151 = arith.constant 0 : index
    %430 = memref.load %arg1[%c0_151] : memref<2xi32, #tpu.memory_space<smem>>
    %431 = vector.broadcast %430 : i32 to vector<2x16xi32>
    %432 = arith.cmpi eq, %427, %431 : vector<2x16xi32>
    %433 = arith.andi %429, %432 : vector<2x16xi1>
    %c1_i32 = arith.constant 1 : i32
    %434 = vector.broadcast %c1_i32 : i32 to vector<2x16xi32>
    %435 = arith.cmpi eq, %426, %434 : vector<2x16xi32>
    %c1_152 = arith.constant 1 : index
    %436 = memref.load %arg1[%c1_152] : memref<2xi32, #tpu.memory_space<smem>>
    %c8_i32 = arith.constant 8 : i32
    %437 = arith.addi %c8_i32, %436 : i32
    %438 = vector.broadcast %437 : i32 to vector<2x16xi32>
    %439 = arith.cmpi eq, %427, %438 : vector<2x16xi32>
    %440 = arith.andi %435, %439 : vector<2x16xi1>
    %441 = arith.ori %433, %440 : vector<2x16xi1>
    %442 = arith.extui %441 : vector<2x16xi1> to vector<2x16xi32>
    %443 = arith.sitofp %442 : vector<2x16xi32> to vector<2x16xf32>
    %444 = arith.truncf %443 : vector<2x16xf32> to vector<2x16xbf16>
    %445 = arith.truncf %425 : vector<16x32xf32> to vector<16x32xbf16>
    %cst_153 = arith.constant dense<0.000000e+00> : vector<2x32xf32>
    %446 = tpu.matmul %444, %445, %cst_153 {dimension_numbers = #tpu.dot_dimension_numbers<[1], [0], [0], [1], [0, 0, 1, 1], [], []>} : vector<2x16xbf16>, vector<16x32xbf16>, vector<2x32xf32> -> vector<2x32xf32>
    %c0_154 = arith.constant 0 : index
    %c0_155 = arith.constant 0 : index
    %447 = vector.load %arg15[%c0_154, %c0_155] : memref<1x32xf32, #tpu.memory_space<vmem>>, vector<1x32xf32>
    %c0_156 = arith.constant 0 : index
    %c0_157 = arith.constant 0 : index
    %448 = vector.load %arg16[%c0_156, %c0_157] : memref<1x32xf32, #tpu.memory_space<vmem>>, vector<1x32xf32>
    %cst_158 = arith.constant dense<0.000000e+00> : vector<2xf32>
    %449 = vector.multi_reduction <add>, %446, %cst_158 [1] : vector<2x32xf32> to vector<2xf32>
    %450 = vector.shape_cast %449 : vector<2xf32> to vector<2x1xf32>
    %cst_159 = arith.constant 3.200000e+01 : f32
    %451 = vector.broadcast %cst_159 : f32 to vector<2x1xf32>
    %452 = arith.divf %450, %451 : vector<2x1xf32>
    %453 = vector.broadcast %452 : vector<2x1xf32> to vector<2x32xf32>
    %454 = arith.subf %446, %453 : vector<2x32xf32>
    %455 = arith.mulf %454, %454 : vector<2x32xf32>
    %cst_160 = arith.constant dense<0.000000e+00> : vector<2xf32>
    %456 = vector.multi_reduction <add>, %455, %cst_160 [1] : vector<2x32xf32> to vector<2xf32>
    %457 = vector.shape_cast %456 : vector<2xf32> to vector<2x1xf32>
    %cst_161 = arith.constant 3.200000e+01 : f32
    %458 = vector.broadcast %cst_161 : f32 to vector<2x1xf32>
    %459 = arith.divf %457, %458 : vector<2x1xf32>
    %460 = vector.broadcast %452 : vector<2x1xf32> to vector<2x32xf32>
    %461 = arith.subf %446, %460 : vector<2x32xf32>
    %cst_162 = arith.constant 9.99999974E-6 : f32
    %462 = vector.broadcast %cst_162 : f32 to vector<2x1xf32>
    %463 = arith.addf %459, %462 : vector<2x1xf32>
    %464 = math.rsqrt %463 : vector<2x1xf32>
    %465 = vector.broadcast %464 : vector<2x1xf32> to vector<2x32xf32>
    %466 = arith.mulf %461, %465 : vector<2x32xf32>
    %467 = vector.broadcast %447 : vector<1x32xf32> to vector<2x32xf32>
    %468 = arith.mulf %466, %467 : vector<2x32xf32>
    %469 = vector.broadcast %448 : vector<1x32xf32> to vector<2x32xf32>
    %470 = arith.addf %468, %469 : vector<2x32xf32>
    %471 = arith.truncf %470 : vector<2x32xf32> to vector<2x32xbf16>
    %c0_163 = arith.constant 0 : index
    %c0_164 = arith.constant 0 : index
    %472 = vector.load %arg17[%c0_163, %c0_164] : memref<32x128xbf16, #tpu.memory_space<vmem>>, vector<32x128xbf16>
    %cst_165 = arith.constant dense<0.000000e+00> : vector<2x128xf32>
    %473 = tpu.matmul %471, %472, %cst_165 {dimension_numbers = #tpu.dot_dimension_numbers<[1], [0], [0], [1], [0, 0, 1, 1], [], []>} : vector<2x32xbf16>, vector<32x128xbf16>, vector<2x128xf32> -> vector<2x128xf32>
    %c0_166 = arith.constant 0 : index
    %c0_167 = arith.constant 0 : index
    %474 = vector.load %arg18[%c0_166, %c0_167] : memref<2x128xf32, #tpu.memory_space<vmem>>, vector<2x128xf32>
    tpu.vector_store %arg18[%c0_166, %c0_167], %473 {strides = array<i32>} : memref<2x128xf32, #tpu.memory_space<vmem>>, vector<2x128xf32>,
    return
  }
  func.func @transform_0(%arg0: i32, %arg1: memref<2xi32, #tpu.memory_space<smem>>) -> (i32, i32) {
    %c0_i32 = arith.constant 0 : i32
    %c0_i32_0 = arith.constant 0 : i32
    %c0_i32_1 = arith.constant 0 : i32
    return %c0_i32, %c0_i32_0 : i32, i32
  }
  func.func @transform_1(%arg0: i32, %arg1: memref<2xi32, #tpu.memory_space<smem>>) -> (i32, i32, i32) {
    %c0_i32 = arith.constant 0 : i32
    %c0_i32_0 = arith.constant 0 : i32
    %c0_i32_1 = arith.constant 0 : i32
    %c0_i32_2 = arith.constant 0 : i32
    return %c0_i32, %c0_i32_0, %c0_i32_1 : i32, i32, i32
  }
  func.func @transform_2(%arg0: i32, %arg1: memref<2xi32, #tpu.memory_space<smem>>) -> (i32, i32, i32) {
    %c0_i32 = arith.constant 0 : i32
    %c0_i32_0 = arith.constant 0 : i32
    %c0_i32_1 = arith.constant 0 : i32
    %c0_i32_2 = arith.constant 0 : i32
    return %c0_i32, %c0_i32_0, %c0_i32_1 : i32, i32, i32
  }
  func.func @transform_3(%arg0: i32, %arg1: memref<2xi32, #tpu.memory_space<smem>>) -> (i32, i32, i32) {
    %c0_i32 = arith.constant 0 : i32
    %c0_i32_0 = arith.constant 0 : i32
    %c0_i32_1 = arith.constant 0 : i32
    %c0_i32_2 = arith.constant 0 : i32
    return %c0_i32, %c0_i32_0, %c0_i32_1 : i32, i32, i32
  }
  func.func @transform_4(%arg0: i32, %arg1: memref<2xi32, #tpu.memory_space<smem>>) -> (i32, i32, i32) {
    %c0_i32 = arith.constant 0 : i32
    %c0_i32_0 = arith.constant 0 : i32
    %c0_i32_1 = arith.constant 0 : i32
    %c0_i32_2 = arith.constant 0 : i32
    return %c0_i32, %c0_i32_0, %c0_i32_1 : i32, i32, i32
  }
  func.func @transform_5(%arg0: i32, %arg1: memref<2xi32, #tpu.memory_space<smem>>) -> (i32, i32, i32) {
    %c0_i32 = arith.constant 0 : i32
    %c0_i32_0 = arith.constant 0 : i32
    %c0_i32_1 = arith.constant 0 : i32
    %c0_i32_2 = arith.constant 0 : i32
    return %c0_i32, %c0_i32_0, %c0_i32_1 : i32, i32, i32
  }
  func.func @transform_6(%arg0: i32, %arg1: memref<2xi32, #tpu.memory_space<smem>>) -> (i32, i32, i32) {
    %c0_i32 = arith.constant 0 : i32
    %c0_i32_0 = arith.constant 0 : i32
    %c0_i32_1 = arith.constant 0 : i32
    %c0_i32_2 = arith.constant 0 : i32
    return %c0_i32, %c0_i32_0, %c0_i32_1 : i32, i32, i32
  }
  func.func @transform_7(%arg0: i32, %arg1: memref<2xi32, #tpu.memory_space<smem>>) -> (i32, i32, i32) {
    %c0_i32 = arith.constant 0 : i32
    %c0_i32_0 = arith.constant 0 : i32
    %c0_i32_1 = arith.constant 0 : i32
    %c0_i32_2 = arith.constant 0 : i32
    return %c0_i32, %c0_i32_0, %c0_i32_1 : i32, i32, i32
  }
  func.func @transform_8(%arg0: i32, %arg1: memref<2xi32, #tpu.memory_space<smem>>) -> (i32, i32, i32) {
    %c0_i32 = arith.constant 0 : i32
    %c0_i32_0 = arith.constant 0 : i32
    %c0_i32_1 = arith.constant 0 : i32
    %c0_i32_2 = arith.constant 0 : i32
    return %c0_i32, %c0_i32_0, %c0_i32_1 : i32, i32, i32
  }
  func.func @transform_9(%arg0: i32, %arg1: memref<2xi32, #tpu.memory_space<smem>>) -> (i32, i32, i32) {
    %c0_i32 = arith.constant 0 : i32
    %c0_i32_0 = arith.constant 0 : i32
    %c0_i32_1 = arith.constant 0 : i32
    %c0_i32_2 = arith.constant 0 : i32
    return %c0_i32, %c0_i32_0, %c0_i32_1 : i32, i32, i32
  }
  func.func @transform_10(%arg0: i32, %arg1: memref<2xi32, #tpu.memory_space<smem>>) -> (i32, i32, i32) {
    %c0_i32 = arith.constant 0 : i32
    %c0_i32_0 = arith.constant 0 : i32
    %c0_i32_1 = arith.constant 0 : i32
    %c0_i32_2 = arith.constant 0 : i32
    return %c0_i32, %c0_i32_0, %c0_i32_1 : i32, i32, i32
  }
  func.func @transform_11(%arg0: i32, %arg1: memref<2xi32, #tpu.memory_space<smem>>) -> (i32, i32, i32) {
    %c0_i32 = arith.constant 0 : i32
    %c0_i32_0 = arith.constant 0 : i32
    %c0_i32_1 = arith.constant 0 : i32
    %c0_i32_2 = arith.constant 0 : i32
    return %c0_i32, %c0_i32_0, %c0_i32_1 : i32, i32, i32
  }
  func.func @transform_12(%arg0: i32, %arg1: memref<2xi32, #tpu.memory_space<smem>>) -> (i32, i32, i32) {
    %c0_i32 = arith.constant 0 : i32
    %c0_i32_0 = arith.constant 0 : i32
    %c0_i32_1 = arith.constant 0 : i32
    %c0_i32_2 = arith.constant 0 : i32
    return %c0_i32, %c0_i32_0, %c0_i32_1 : i32, i32, i32
  }
  func.func @transform_13(%arg0: i32, %arg1: memref<2xi32, #tpu.memory_space<smem>>) -> (i32, i32) {
    %c0_i32 = arith.constant 0 : i32
    %c0_i32_0 = arith.constant 0 : i32
    %c0_i32_1 = arith.constant 0 : i32
    return %c0_i32, %c0_i32_0 : i32, i32
  }
  func.func @transform_14(%arg0: i32, %arg1: memref<2xi32, #tpu.memory_space<smem>>) -> (i32, i32) {
    %c0_i32 = arith.constant 0 : i32
    %c0_i32_0 = arith.constant 0 : i32
    %c0_i32_1 = arith.constant 0 : i32
    return %c0_i32, %c0_i32_0 : i32, i32
  }
  func.func @transform_15(%arg0: i32, %arg1: memref<2xi32, #tpu.memory_space<smem>>) -> (i32, i32) {
    %c0_i32 = arith.constant 0 : i32
    %c0_i32_0 = arith.constant 0 : i32
    %c0_i32_1 = arith.constant 0 : i32
    return %c0_i32, %c0_i32_0 : i32, i32
  }
  func.func @transform_16(%arg0: i32, %arg1: memref<2xi32, #tpu.memory_space<smem>>) -> (i32, i32) {
    %c0_i32 = arith.constant 0 : i32
    %c0_i32_0 = arith.constant 0 : i32
    %c0_i32_1 = arith.constant 0 : i32
    return %c0_i32, %c0_i32_0 : i32, i32
  }
}

</mosaic_0001>

<llo_original>
// kernel: get_text_features.1
$region0: #{get_text_features.1}
  #allocation0 [shape = 'u32[]', space=smem, size = 0x4, offset = 0x4, fixed_abs, tag = 'smem constant byte address 0x4 - core index']
  #allocation1 [shape = 'u32[72,128]{1,0:T(1,128)}', space=vmem, size = 0x9000, scoped, tag = 'internal scratch']
  #allocation2 [shape = 's32[1]{0}', space=sflag, size = 0x4, scoped, tag = 'scoped memory for get_text_features.1']
  #allocation3 [shape = 'u8[512]{0}', space=smem, size = 0x200, scoped, tag = 'prefetched SMEM operand 0']
  %s0 = inlined_call_operand.vmem [shape: s32[2], index: 0, kind: input, shape index: {}]
  %s1 = inlined_call_operand.vmem [shape: f32[16,32], index: 1, kind: input, shape index: {}]
  %s2 = inlined_call_operand.vmem [shape: f32[2,1,32], index: 2, kind: input, shape index: {}]
  %s3 = inlined_call_operand.vmem [shape: f32[2,1,32], index: 3, kind: input, shape index: {}]
  %s4 = inlined_call_operand.vmem [shape: bf16[2,32,96], index: 4, kind: input, shape index: {}]
  %s5 = inlined_call_operand.vmem [shape: f32[2,1,96], index: 5, kind: input, shape index: {}]
  %s6 = inlined_call_operand.vmem [shape: bf16[2,32,32], index: 6, kind: input, shape index: {}]
  %s7 = inlined_call_operand.vmem [shape: f32[2,1,32], index: 7, kind: input, shape index: {}]
  %s8 = inlined_call_operand.vmem [shape: f32[2,1,32], index: 8, kind: input, shape index: {}]
  %s9 = inlined_call_operand.vmem [shape: f32[2,1,32], index: 9, kind: input, shape index: {}]
  %s10 = inlined_call_operand.vmem [shape: bf16[2,32,128], index: 10, kind: input, shape index: {}]
  %s11 = inlined_call_operand.vmem [shape: f32[2,1,128], index: 11, kind: input, shape index: {}]
  %s12 = inlined_call_operand.vmem [shape: bf16[2,128,32], index: 12, kind: input, shape index: {}]
  %s13 = inlined_call_operand.vmem [shape: f32[2,1,32], index: 13, kind: input, shape index: {}]
  %s14 = inlined_call_operand.vmem [shape: f32[1,32], index: 14, kind: input, shape index: {}]
  %s15 = inlined_call_operand.vmem [shape: f32[1,32], index: 15, kind: input, shape index: {}]
  %s16 = inlined_call_operand.vmem [shape: bf16[32,128], index: 16, kind: input, shape index: {}]
  %s17 = inlined_call_operand.hbm [shape: f32[2,128], index: 17, kind: output, shape index: {}]
  %s18 = sld [smem:[#allocation0]]
  $region74: #{get_text_features.1} parent=0
    _
  %s20 = ssub.s32 1, %s18
  %s21 = scalar_select 0, %s20, %s18
  %s23 = sshll.u32 %s0, 4
  %s24 = int_to_ptr.vmem [resolvable:$true] %s23
  %26 = dma.vmem_to_smem %s24, 16, [#allocation3], [#allocation2]
  %28 = dma.done [#allocation2], 16
  %29 = sfence
  $region1: #{get_text_features.1} parent=0
    #allocation4 [shape = 'u8[1024]{0}', space=vmem, size = 0x400, scoped, tag = 'output window, operand 0, single buffered']
    #allocation5 [shape = 's32[1]{0}', space=sflag, size = 0x4, scoped, tag = 'scoped memory for get_text_features.1']
    %30 = vsyncpa [#allocation5], 0
    // Predicated region
    $region2: #{get_text_features.1} parent=1 // pred_check
      _
    $region3: #{get_text_features.1} parent=1 // pred_check_branch
      %32 = sbr.rel (0) target = $region5
    $region4: #{get_text_features.1} parent=1 // pred_region
      _
    $region5: #{get_text_features.1} parent=1 // pred_fallthru
      _
    // Predicated region
    $region6: #{get_text_features.1} parent=1 // pred_check
      _
    $region7: #{get_text_features.1} parent=1 // pred_check_branch
      %34 = sbr.rel (0) target = $region9
    $region8: #{get_text_features.1} parent=1 // pred_region
      _
    $region9: #{get_text_features.1} parent=1 // pred_fallthru
      _
    // Predicated region
    $region10: #{get_text_features.1} parent=1 // pred_check
      _
    $region11: #{get_text_features.1} parent=1 // pred_check_branch
      %36 = sbr.rel (0) target = $region13
    $region12: #{get_text_features.1} parent=1 // pred_region
      _
    $region13: #{get_text_features.1} parent=1 // pred_fallthru
      _
    // Predicated region
    $region14: #{get_text_features.1} parent=1 // pred_check
      _
    $region15: #{get_text_features.1} parent=1 // pred_check_branch
      %38 = sbr.rel (0) target = $region17
    $region16: #{get_text_features.1} parent=1 // pred_region
      _
    $region17: #{get_text_features.1} parent=1 // pred_fallthru
      _
    // Predicated region
    $region18: #{get_text_features.1} parent=1 // pred_check
      _
    $region19: #{get_text_features.1} parent=1 // pred_check_branch
      %40 = sbr.rel (0) target = $region21
    $region20: #{get_text_features.1} parent=1 // pred_region
      _
    $region21: #{get_text_features.1} parent=1 // pred_fallthru
      _
    // Predicated region
    $region22: #{get_text_features.1} parent=1 // pred_check
      _
    $region23: #{get_text_features.1} parent=1 // pred_check_branch
      %42 = sbr.rel (0) target = $region25
    $region24: #{get_text_features.1} parent=1 // pred_region
      _
    $region25: #{get_text_features.1} parent=1 // pred_fallthru
      _
    // Predicated region
    $region26: #{get_text_features.1} parent=1 // pred_check
      _
    $region27: #{get_text_features.1} parent=1 // pred_check_branch
      %44 = sbr.rel (0) target = $region29
    $region28: #{get_text_features.1} parent=1 // pred_region
      _
    $region29: #{get_text_features.1} parent=1 // pred_fallthru
      _
    // Predicated region
    $region30: #{get_text_features.1} parent=1 // pred_check
      _
    $region31: #{get_text_features.1} parent=1 // pred_check_branch
      %46 = sbr.rel (0) target = $region33
    $region32: #{get_text_features.1} parent=1 // pred_region
      _
    $region33: #{get_text_features.1} parent=1 // pred_fallthru
      _
    // Predicated region
    $region34: #{get_text_features.1} parent=1 // pred_check
      _
    $region35: #{get_text_features.1} parent=1 // pred_check_branch
      %48 = sbr.rel (0) target = $region37
    $region36: #{get_text_features.1} parent=1 // pred_region
      _
    $region37: #{get_text_features.1} parent=1 // pred_fallthru
      _
    // Predicated region
    $region38: #{get_text_features.1} parent=1 // pred_check
      _
    $region39: #{get_text_features.1} parent=1 // pred_check_branch
      %50 = sbr.rel (0) target = $region41
    $region40: #{get_text_features.1} parent=1 // pred_region
      _
    $region41: #{get_text_features.1} parent=1 // pred_fallthru
      _
    // Predicated region
    $region42: #{get_text_features.1} parent=1 // pred_check
      _
    $region43: #{get_text_features.1} parent=1 // pred_check_branch
      %52 = sbr.rel (0) target = $region45
    $region44: #{get_text_features.1} parent=1 // pred_region
      _
    $region45: #{get_text_features.1} parent=1 // pred_fallthru
      _
    // Predicated region
    $region46: #{get_text_features.1} parent=1 // pred_check
      _
    $region47: #{get_text_features.1} parent=1 // pred_check_branch
      %54 = sbr.rel (0) target = $region49
    $region48: #{get_text_features.1} parent=1 // pred_region
      _
    $region49: #{get_text_features.1} parent=1 // pred_fallthru
      _
    // Predicated region
    $region50: #{get_text_features.1} parent=1 // pred_check
      _
    $region51: #{get_text_features.1} parent=1 // pred_check_branch
      %56 = sbr.rel (0) target = $region53
    $region52: #{get_text_features.1} parent=1 // pred_region
      _
    $region53: #{get_text_features.1} parent=1 // pred_fallthru
      _
    // Predicated region
    $region54: #{get_text_features.1} parent=1 // pred_check
      _
    $region55: #{get_text_features.1} parent=1 // pred_check_branch
      %58 = sbr.rel (0) target = $region57
    $region56: #{get_text_features.1} parent=1 // pred_region
      _
    $region57: #{get_text_features.1} parent=1 // pred_fallthru
      _
    // Predicated region
    $region58: #{get_text_features.1} parent=1 // pred_check
      _
    $region59: #{get_text_features.1} parent=1 // pred_check_branch
      %60 = sbr.rel (0) target = $region61
    $region60: #{get_text_features.1} parent=1 // pred_region
      _
    $region61: #{get_text_features.1} parent=1 // pred_fallthru
      _
    // Predicated region
    $region62: #{get_text_features.1} parent=1 // pred_check
      _
    $region63: #{get_text_features.1} parent=1 // pred_check_branch
      %62 = sbr.rel (0) target = $region65
    $region64: #{get_text_features.1} parent=1 // pred_region
      _
    $region65: #{get_text_features.1} parent=1 // pred_fallthru
      _
    %v64 = vld [vmem:[%s1] sm:$0xff]
    %v65 = vld [vmem:[%s1 + $0x8] sm:$0xff]
    %v66 = vlaneseq
    %v67 = vshrl.u32 %v66, 7
    %v68 = vlaneseq
    %v69 = vand.u32 %v68, 127
    %vm70 = vcmp.le.s32.totalorder %v69, %v67
    %v71 = vld [vmem:[%s2] sm:$0x1]
    %v72 = vld [vmem:[%s3] sm:$0x1]
    %vm73 = vcmask 261120
    %v74 = vsel %vm73, %v64, 0.0
    %75 = vadd.xlane.f32.xlu0 %v74
    %v76 = vpop.xlane.xlu0 %75
    %v77 = vsel %vm73, %v65, 0.0
    %78 = vadd.xlane.f32.xlu0 %v77
    %v79 = vpop.xlane.xlu0 %78
    %v80 = vrcp.pop 32.0
    %v81 = vmul.f32 32.0, %v80
    %v82 = vsub.f32 1.0, %v81
    %v83 = vmul.f32 %v80, %v82
    %v84 = vadd.f32 %v80, %v83
    %vm85 = vweird.f32 %v80
    %v86 = vsel %vm85, %v80, %v84
    %v87 = vmul.f32 %v76, %v86
    %v88 = vmul.f32 %v79, %v86
    %v89 = vsub.f32 %v64, %v87
    %v90 = vsub.f32 %v65, %v88
    %v91 = vmul.f32 %v89, %v89
    %v92 = vmul.f32 %v90, %v90
    %v93 = vsel %vm73, %v91, 0.0
    %94 = vadd.xlane.f32.xlu0 %v93
    %v95 = vpop.xlane.xlu0 %94
    %v96 = vsel %vm73, %v92, 0.0
    %97 = vadd.xlane.f32.xlu0 %v96
    %v98 = vpop.xlane.xlu0 %97
    %v99 = vmul.f32 %v95, %v86
    %v100 = vmul.f32 %v98, %v86
    %v101 = vadd.f32 %v99, 1e-05
    %v102 = vadd.f32 %v100, 1e-05
    %v103 = vrsqrt.pop %v101
    %v104 = vmul.f32 %v103, %v101
    %v105 = vmul.f32 %v104, %v103
    %v106 = vmul.f32 0.5, %v105
    %v107 = vsub.f32 1.5, %v106
    %v108 = vmul.f32 %v103, %v107
    %vm109 = vweird.f32 %v101
    %vm110 = vweird.f32 %v103
    %vm111 = vmor %vm109, %vm110
    %v112 = vsel %vm111, %v103, %v108
    %v113 = vrsqrt.pop %v102
    %v114 = vmul.f32 %v113, %v102
    %v115 = vmul.f32 %v114, %v113
    %v116 = vmul.f32 0.5, %v115
    %v117 = vsub.f32 1.5, %v116
    %v118 = vmul.f32 %v113, %v117
    %vm119 = vweird.f32 %v102
    %vm120 = vweird.f32 %v113
    %vm121 = vmor %vm119, %vm120
    %v122 = vsel %vm121, %v113, %v118
    %v123 = vmul.f32 %v89, %v112
    %v124 = vmul.f32 %v90, %v122
    %v126 = vperm.slane %v71, 0
    %v128 = vmul.f32 %v123, %v126
    %v129 = vmul.f32 %v124, %v126
    %v131 = vperm.slane %v72, 0
    %v133 = vadd.f32 %v128, %v131
    %v134 = vadd.f32 %v129, %v131
    %v135 = vpack.c.bf16 %v134, %v133
    %v136 = vld [vmem:[%s4] sm:$0xf]
    %v137 = vld [vmem:[%s4 + $0x4] sm:$0xf]
    %v138 = vld [vmem:[%s4 + $0x8] sm:$0xf]
    %v139 = vld [vmem:[%s4 + $0xc] sm:$0xf]
    %v140 = vld [vmem:[%s5] sm:$0x1]
    %v142 = vperm.slane %v140, 0
    %v148 = vunpack.c.l.b16 %v136
    %v149 = vunpack.c.l.b16 %v137
    %v150 = vunpack.c.l.b16 %v138
    %v151 = vunpack.c.l.b16 %v139
    %v152 = vpack.c.b16 %v149, %v148
    %v153 = vpack.c.b16 %v151, %v150
    %v157 = vsel %vm73, %v135, 0
    %159 = vmatpush.bf16.msra.mxu0 0
    %160 = vmatpush.bf16.msra.mxu0 0
    %161 = vmatpush.bf16.msra.mxu0 0
    %162 = vmatpush.bf16.msra.mxu0 0
    %163 = vmatpush.bf16.msra.mxu0 0
    %164 = vmatpush.bf16.msra.mxu0 0
    %165 = vmatpush.bf16.msra.mxu0 %v153
    %166 = vmatpush.bf16.msra.mxu0 %v152
    %167 = vmatmul.bf16.gmra.mxu0 %v157
    %v168 = vpop.f32.mrf.mxu0
    %v169 = vadd.f32 %v142, %v168
    %v170 = vpop.f32.mrf.mxu0
    %v171 = vadd.f32 %v142, %v170
    %172 = vdwg.mxu0
    %v173 = vmul.f32 %v169, 0.35355338
    %v174 = vmul.f32 %v171, 0.35355338
    %v175 = vpack.c.bf16 %v173, %v173
    %v176 = vpack.c.bf16 %v174, %v174
    %v177 = vpack.c.bf16 %v169, %v169
    %v178 = vpack.c.bf16 %v171, %v171
    %v180 = vunpack.c.l.b16 %v177
    %v181 = vpack.c.b16 %v180, %v180
    %182 = vrot.lane.b32.xlu0 %v181, 96
    %v183 = vpop.permute.xlu0 %182
    %vm184 = vcmask 64512
    %v186 = vsel %vm184, %v175, 0
    %v189 = vsel %vm184, %v183, 0
    %191 = vmatpush.bf16.xpose.msra.mxu0 0
    %192 = vmatpush.bf16.xpose.msra.mxu0 0
    %193 = vmatpush.bf16.xpose.msra.mxu0 0
    %194 = vmatpush.bf16.xpose.msra.mxu0 0
    %195 = vmatpush.bf16.xpose.msra.mxu0 0
    %196 = vmatpush.bf16.xpose.msra.mxu0 0
    %197 = vmatpush.bf16.xpose.msra.mxu0 0
    %198 = vmatpush.bf16.xpose.msra.mxu0 %v189
    %199 = vmatmul.bf16.gmra.mxu0 %v186
    %v200 = vpop.f32.mrf.mxu0
    %v201 = vadd.f32 0.0, %v200
    %v202 = vpop.f32.mrf.mxu0
    %203 = vdwg.mxu0
    %v205 = vunpack.c.l.b16 %v178
    %v206 = vpack.c.b16 %v205, %v205
    %207 = vrot.lane.b32.xlu0 %v206, 96
    %v208 = vpop.permute.xlu0 %207
    %v210 = vsel %vm184, %v176, 0
    %v213 = vsel %vm184, %v208, 0
    %215 = vmatpush.bf16.xpose.msra.mxu0 0
    %216 = vmatpush.bf16.xpose.msra.mxu0 0
    %217 = vmatpush.bf16.xpose.msra.mxu0 0
    %218 = vmatpush.bf16.xpose.msra.mxu0 0
    %219 = vmatpush.bf16.xpose.msra.mxu0 0
    %220 = vmatpush.bf16.xpose.msra.mxu0 0
    %221 = vmatpush.bf16.xpose.msra.mxu0 0
    %222 = vmatpush.bf16.xpose.msra.mxu0 %v213
    %223 = vmatmul.bf16.gmra.mxu0 %v210
    %v224 = vpop.f32.mrf.mxu0
    %v225 = vadd.f32 0.0, %v224
    %v226 = vpop.f32.mrf.mxu0
    %227 = vdwg.mxu0
    %v228 = vsel %vm70, 1, 0
    %vm229 = vcmp.eq.s32.totalorder %v228, 1
    %v230 = vsel %vm229, %v201, -1e+30
    %v231 = vsel %vm229, %v225, -1e+30
    %v232 = vsel %vm184, %v230, -inf
    %233 = vmax.xlane.f32.xlu0 %v232
    %v234 = vpop.xlane.xlu0 %233
    %v235 = vsel %vm184, %v231, -inf
    %236 = vmax.xlane.f32.xlu0 %v235
    %v237 = vpop.xlane.xlu0 %236
    %v238 = vsub.f32 %v230, %v234
    %v239 = vsub.f32 %v231, %v237
    %v240 = vmul.f32 %v238, 1.442695
    %v241 = vpow.pop %v240
    %v242 = vmul.f32 %v239, 1.442695
    %v243 = vpow.pop %v242
    %v244 = vsel %vm184, %v241, 0.0
    %245 = vadd.xlane.f32.xlu0 %v244
    %v246 = vpop.xlane.xlu0 %245
    %v247 = vsel %vm184, %v243, 0.0
    %248 = vadd.xlane.f32.xlu0 %v247
    %v249 = vpop.xlane.xlu0 %248
    %v250 = vrcp.pop %v246
    %v251 = vrcp.pop %v249
    %v252 = vmul.f32 %v241, %v250
    %v253 = vmul.f32 %v243, %v251
    %v254 = vpack.c.bf16 %v252, %v252
    %v255 = vpack.c.bf16 %v253, %v253
    %256 = vrot.lane.b32.xlu0 %v181, 64
    %v257 = vpop.permute.xlu0 %256
    %v259 = vsel %vm184, %v254, 0
    %vm261 = vcmask 1043456
    %v263 = vsel %vm261, %v257, 0
    %265 = vmatpush.bf16.msra.mxu0 0
    %266 = vmatpush.bf16.msra.mxu0 0
    %267 = vmatpush.bf16.msra.mxu0 0
    %268 = vmatpush.bf16.msra.mxu0 0
    %269 = vmatpush.bf16.msra.mxu0 0
    %270 = vmatpush.bf16.msra.mxu0 0
    %271 = vmatpush.bf16.msra.mxu0 0
    %272 = vmatpush.bf16.msra.mxu0 %v263
    %273 = vmatmul.bf16.gmra.mxu0 %v259
    %v274 = vpop.f32.mrf.mxu0
    %v275 = vadd.f32 0.0, %v274
    %v276 = vpop.f32.mrf.mxu0
    %277 = vdwg.mxu0
    %278 = vrot.lane.b32.xlu0 %v206, 64
    %v279 = vpop.permute.xlu0 %278
    %v281 = vsel %vm184, %v255, 0
    %v284 = vsel %vm261, %v279, 0
    %286 = vmatpush.bf16.msra.mxu0 0
    %287 = vmatpush.bf16.msra.mxu0 0
    %288 = vmatpush.bf16.msra.mxu0 0
    %289 = vmatpush.bf16.msra.mxu0 0
    %290 = vmatpush.bf16.msra.mxu0 0
    %291 = vmatpush.bf16.msra.mxu0 0
    %292 = vmatpush.bf16.msra.mxu0 0
    %293 = vmatpush.bf16.msra.mxu0 %v284
    %294 = vmatmul.bf16.gmra.mxu0 %v281
    %v295 = vpop.f32.mrf.mxu0
    %v296 = vadd.f32 0.0, %v295
    %v297 = vpop.f32.mrf.mxu0
    %298 = vdwg.mxu0
    %v300 = vunpack.c.l.b16 %v175
    %v301 = vpack.c.b16 %v300, %v300
    %302 = vrot.lane.b32.xlu0 %v301, 120
    %v303 = vpop.permute.xlu0 %302
    %304 = vrot.lane.b32.xlu0 %v181, 88
    %v305 = vpop.permute.xlu0 %304
    %v307 = vsel %vm184, %v303, 0
    %v310 = vsel %vm184, %v305, 0
    %312 = vmatpush.bf16.xpose.msra.mxu0 0
    %313 = vmatpush.bf16.xpose.msra.mxu0 0
    %314 = vmatpush.bf16.xpose.msra.mxu0 0
    %315 = vmatpush.bf16.xpose.msra.mxu0 0
    %316 = vmatpush.bf16.xpose.msra.mxu0 0
    %317 = vmatpush.bf16.xpose.msra.mxu0 0
    %318 = vmatpush.bf16.xpose.msra.mxu0 0
    %319 = vmatpush.bf16.xpose.msra.mxu0 %v310
    %320 = vmatmul.bf16.gmra.mxu0 %v307
    %v321 = vpop.f32.mrf.mxu0
    %v322 = vadd.f32 0.0, %v321
    %v323 = vpop.f32.mrf.mxu0
    %324 = vdwg.mxu0
    %v326 = vunpack.c.l.b16 %v176
    %v327 = vpack.c.b16 %v326, %v326
    %328 = vrot.lane.b32.xlu0 %v327, 120
    %v329 = vpop.permute.xlu0 %328
    %330 = vrot.lane.b32.xlu0 %v206, 88
    %v331 = vpop.permute.xlu0 %330
    %v333 = vsel %vm184, %v329, 0
    %v336 = vsel %vm184, %v331, 0
    %338 = vmatpush.bf16.xpose.msra.mxu0 0
    %339 = vmatpush.bf16.xpose.msra.mxu0 0
    %340 = vmatpush.bf16.xpose.msra.mxu0 0
    %341 = vmatpush.bf16.xpose.msra.mxu0 0
    %342 = vmatpush.bf16.xpose.msra.mxu0 0
    %343 = vmatpush.bf16.xpose.msra.mxu0 0
    %344 = vmatpush.bf16.xpose.msra.mxu0 0
    %345 = vmatpush.bf16.xpose.msra.mxu0 %v336
    %346 = vmatmul.bf16.gmra.mxu0 %v333
    %v347 = vpop.f32.mrf.mxu0
    %v348 = vadd.f32 0.0, %v347
    %v349 = vpop.f32.mrf.mxu0
    %350 = vdwg.mxu0
    %v351 = vsel %vm229, %v322, -1e+30
    %v352 = vsel %vm229, %v348, -1e+30
    %v353 = vsel %vm184, %v351, -inf
    %354 = vmax.xlane.f32.xlu0 %v353
    %v355 = vpop.xlane.xlu0 %354
    %v356 = vsel %vm184, %v352, -inf
    %357 = vmax.xlane.f32.xlu0 %v356
    %v358 = vpop.xlane.xlu0 %357
    %v359 = vsub.f32 %v351, %v355
    %v360 = vsub.f32 %v352, %v358
    %v361 = vmul.f32 %v359, 1.442695
    %v362 = vpow.pop %v361
    %v363 = vmul.f32 %v360, 1.442695
    %v364 = vpow.pop %v363
    %v365 = vsel %vm184, %v362, 0.0
    %366 = vadd.xlane.f32.xlu0 %v365
    %v367 = vpop.xlane.xlu0 %366
    %v368 = vsel %vm184, %v364, 0.0
    %369 = vadd.xlane.f32.xlu0 %v368
    %v370 = vpop.xlane.xlu0 %369
    %v371 = vrcp.pop %v367
    %v372 = vrcp.pop %v370
    %v373 = vmul.f32 %v362, %v371
    %v374 = vmul.f32 %v364, %v372
    %v375 = vpack.c.bf16 %v373, %v373
    %v376 = vpack.c.bf16 %v374, %v374
    %377 = vrot.lane.b32.xlu0 %v181, 56
    %v378 = vpop.permute.xlu0 %377
    %v380 = vsel %vm184, %v375, 0
    %v383 = vsel %vm261, %v378, 0
    %385 = vmatpush.bf16.msra.mxu0 0
    %386 = vmatpush.bf16.msra.mxu0 0
    %387 = vmatpush.bf16.msra.mxu0 0
    %388 = vmatpush.bf16.msra.mxu0 0
    %389 = vmatpush.bf16.msra.mxu0 0
    %390 = vmatpush.bf16.msra.mxu0 0
    %391 = vmatpush.bf16.msra.mxu0 0
    %392 = vmatpush.bf16.msra.mxu0 %v383
    %393 = vmatmul.bf16.gmra.mxu0 %v380
    %v394 = vpop.f32.mrf.mxu0
    %v395 = vadd.f32 0.0, %v394
    %v396 = vpop.f32.mrf.mxu0
    %397 = vdwg.mxu0
    %398 = vrot.lane.b32.xlu0 %v206, 56
    %v399 = vpop.permute.xlu0 %398
    %v401 = vsel %vm184, %v376, 0
    %v404 = vsel %vm261, %v399, 0
    %406 = vmatpush.bf16.msra.mxu0 0
    %407 = vmatpush.bf16.msra.mxu0 0
    %408 = vmatpush.bf16.msra.mxu0 0
    %409 = vmatpush.bf16.msra.mxu0 0
    %410 = vmatpush.bf16.msra.mxu0 0
    %411 = vmatpush.bf16.msra.mxu0 0
    %412 = vmatpush.bf16.msra.mxu0 0
    %413 = vmatpush.bf16.msra.mxu0 %v404
    %414 = vmatmul.bf16.gmra.mxu0 %v401
    %v415 = vpop.f32.mrf.mxu0
    %v416 = vadd.f32 0.0, %v415
    %v417 = vpop.f32.mrf.mxu0
    %418 = vdwg.mxu0
    %419 = vrot.lane.b32.xlu0 %v301, 112
    %v420 = vpop.permute.xlu0 %419
    %421 = vrot.lane.b32.xlu0 %v181, 80
    %v422 = vpop.permute.xlu0 %421
    %v424 = vsel %vm184, %v420, 0
    %v427 = vsel %vm184, %v422, 0
    %429 = vmatpush.bf16.xpose.msra.mxu0 0
    %430 = vmatpush.bf16.xpose.msra.mxu0 0
    %431 = vmatpush.bf16.xpose.msra.mxu0 0
    %432 = vmatpush.bf16.xpose.msra.mxu0 0
    %433 = vmatpush.bf16.xpose.msra.mxu0 0
    %434 = vmatpush.bf16.xpose.msra.mxu0 0
    %435 = vmatpush.bf16.xpose.msra.mxu0 0
    %436 = vmatpush.bf16.xpose.msra.mxu0 %v427
    %437 = vmatmul.bf16.gmra.mxu0 %v424
    %v438 = vpop.f32.mrf.mxu0
    %v439 = vadd.f32 0.0, %v438
    %v440 = vpop.f32.mrf.mxu0
    %441 = vdwg.mxu0
    %442 = vrot.lane.b32.xlu0 %v327, 112
    %v443 = vpop.permute.xlu0 %442
    %444 = vrot.lane.b32.xlu0 %v206, 80
    %v445 = vpop.permute.xlu0 %444
    %v447 = vsel %vm184, %v443, 0
    %v450 = vsel %vm184, %v445, 0
    %452 = vmatpush.bf16.xpose.msra.mxu0 0
    %453 = vmatpush.bf16.xpose.msra.mxu0 0
    %454 = vmatpush.bf16.xpose.msra.mxu0 0
    %455 = vmatpush.bf16.xpose.msra.mxu0 0
    %456 = vmatpush.bf16.xpose.msra.mxu0 0
    %457 = vmatpush.bf16.xpose.msra.mxu0 0
    %458 = vmatpush.bf16.xpose.msra.mxu0 0
    %459 = vmatpush.bf16.xpose.msra.mxu0 %v450
    %460 = vmatmul.bf16.gmra.mxu0 %v447
    %v461 = vpop.f32.mrf.mxu0
    %v462 = vadd.f32 0.0, %v461
    %v463 = vpop.f32.mrf.mxu0
    %464 = vdwg.mxu0
    %v465 = vsel %vm229, %v439, -1e+30
    %v466 = vsel %vm229, %v462, -1e+30
    %v467 = vsel %vm184, %v465, -inf
    %468 = vmax.xlane.f32.xlu0 %v467
    %v469 = vpop.xlane.xlu0 %468
    %v470 = vsel %vm184, %v466, -inf
    %471 = vmax.xlane.f32.xlu0 %v470
    %v472 = vpop.xlane.xlu0 %471
    %v473 = vsub.f32 %v465, %v469
    %v474 = vsub.f32 %v466, %v472
    %v475 = vmul.f32 %v473, 1.442695
    %v476 = vpow.pop %v475
    %v477 = vmul.f32 %v474, 1.442695
    %v478 = vpow.pop %v477
    %v479 = vsel %vm184, %v476, 0.0
    %480 = vadd.xlane.f32.xlu0 %v479
    %v481 = vpop.xlane.xlu0 %480
    %v482 = vsel %vm184, %v478, 0.0
    %483 = vadd.xlane.f32.xlu0 %v482
    %v484 = vpop.xlane.xlu0 %483
    %v485 = vrcp.pop %v481
    %v486 = vrcp.pop %v484
    %v487 = vmul.f32 %v476, %v485
    %v488 = vmul.f32 %v478, %v486
    %v489 = vpack.c.bf16 %v487, %v487
    %v490 = vpack.c.bf16 %v488, %v488
    %491 = vrot.lane.b32.xlu0 %v181, 48
    %v492 = vpop.permute.xlu0 %491
    %v494 = vsel %vm184, %v489, 0
    %v497 = vsel %vm261, %v492, 0
    %499 = vmatpush.bf16.msra.mxu0 0
    %500 = vmatpush.bf16.msra.mxu0 0
    %501 = vmatpush.bf16.msra.mxu0 0
    %502 = vmatpush.bf16.msra.mxu0 0
    %503 = vmatpush.bf16.msra.mxu0 0
    %504 = vmatpush.bf16.msra.mxu0 0
    %505 = vmatpush.bf16.msra.mxu0 0
    %506 = vmatpush.bf16.msra.mxu0 %v497
    %507 = vmatmul.bf16.gmra.mxu0 %v494
    %v508 = vpop.f32.mrf.mxu0
    %v509 = vadd.f32 0.0, %v508
    %v510 = vpop.f32.mrf.mxu0
    %511 = vdwg.mxu0
    %512 = vrot.lane.b32.xlu0 %v206, 48
    %v513 = vpop.permute.xlu0 %512
    %v515 = vsel %vm184, %v490, 0
    %v518 = vsel %vm261, %v513, 0
    %520 = vmatpush.bf16.msra.mxu0 0
    %521 = vmatpush.bf16.msra.mxu0 0
    %522 = vmatpush.bf16.msra.mxu0 0
    %523 = vmatpush.bf16.msra.mxu0 0
    %524 = vmatpush.bf16.msra.mxu0 0
    %525 = vmatpush.bf16.msra.mxu0 0
    %526 = vmatpush.bf16.msra.mxu0 0
    %527 = vmatpush.bf16.msra.mxu0 %v518
    %528 = vmatmul.bf16.gmra.mxu0 %v515
    %v529 = vpop.f32.mrf.mxu0
    %v530 = vadd.f32 0.0, %v529
    %v531 = vpop.f32.mrf.mxu0
    %532 = vdwg.mxu0
    %533 = vrot.lane.b32.xlu0 %v301, 104
    %v534 = vpop.permute.xlu0 %533
    %535 = vrot.lane.b32.xlu0 %v181, 72
    %v536 = vpop.permute.xlu0 %535
    %v538 = vsel %vm184, %v534, 0
    %v541 = vsel %vm184, %v536, 0
    %543 = vmatpush.bf16.xpose.msra.mxu0 0
    %544 = vmatpush.bf16.xpose.msra.mxu0 0
    %545 = vmatpush.bf16.xpose.msra.mxu0 0
    %546 = vmatpush.bf16.xpose.msra.mxu0 0
    %547 = vmatpush.bf16.xpose.msra.mxu0 0
    %548 = vmatpush.bf16.xpose.msra.mxu0 0
    %549 = vmatpush.bf16.xpose.msra.mxu0 0
    %550 = vmatpush.bf16.xpose.msra.mxu0 %v541
    %551 = vmatmul.bf16.gmra.mxu0 %v538
    %v552 = vpop.f32.mrf.mxu0
    %v553 = vadd.f32 0.0, %v552
    %v554 = vpop.f32.mrf.mxu0
    %555 = vdwg.mxu0
    %556 = vrot.lane.b32.xlu0 %v327, 104
    %v557 = vpop.permute.xlu0 %556
    %558 = vrot.lane.b32.xlu0 %v206, 72
    %v559 = vpop.permute.xlu0 %558
    %v561 = vsel %vm184, %v557, 0
    %v564 = vsel %vm184, %v559, 0
    %566 = vmatpush.bf16.xpose.msra.mxu0 0
    %567 = vmatpush.bf16.xpose.msra.mxu0 0
    %568 = vmatpush.bf16.xpose.msra.mxu0 0
    %569 = vmatpush.bf16.xpose.msra.mxu0 0
    %570 = vmatpush.bf16.xpose.msra.mxu0 0
    %571 = vmatpush.bf16.xpose.msra.mxu0 0
    %572 = vmatpush.bf16.xpose.msra.mxu0 0
    %573 = vmatpush.bf16.xpose.msra.mxu0 %v564
    %574 = vmatmul.bf16.gmra.mxu0 %v561
    %v575 = vpop.f32.mrf.mxu0
    %v576 = vadd.f32 0.0, %v575
    %v577 = vpop.f32.mrf.mxu0
    %578 = vdwg.mxu0
    %v579 = vsel %vm229, %v553, -1e+30
    %v580 = vsel %vm229, %v576, -1e+30
    %v581 = vsel %vm184, %v579, -inf
    %582 = vmax.xlane.f32.xlu0 %v581
    %v583 = vpop.xlane.xlu0 %582
    %v584 = vsel %vm184, %v580, -inf
    %585 = vmax.xlane.f32.xlu0 %v584
    %v586 = vpop.xlane.xlu0 %585
    %v587 = vsub.f32 %v579, %v583
    %v588 = vsub.f32 %v580, %v586
    %v589 = vmul.f32 %v587, 1.442695
    %v590 = vpow.pop %v589
    %v591 = vmul.f32 %v588, 1.442695
    %v592 = vpow.pop %v591
    %v593 = vsel %vm184, %v590, 0.0
    %594 = vadd.xlane.f32.xlu0 %v593
    %v595 = vpop.xlane.xlu0 %594
    %v596 = vsel %vm184, %v592, 0.0
    %597 = vadd.xlane.f32.xlu0 %v596
    %v598 = vpop.xlane.xlu0 %597
    %v599 = vrcp.pop %v595
    %v600 = vrcp.pop %v598
    %v601 = vmul.f32 %v590, %v599
    %v602 = vmul.f32 %v592, %v600
    %v603 = vpack.c.bf16 %v601, %v601
    %v604 = vpack.c.bf16 %v602, %v602
    %605 = vrot.lane.b32.xlu0 %v181, 40
    %v606 = vpop.permute.xlu0 %605
    %v608 = vsel %vm184, %v603, 0
    %v611 = vsel %vm261, %v606, 0
    %613 = vmatpush.bf16.msra.mxu0 0
    %614 = vmatpush.bf16.msra.mxu0 0
    %615 = vmatpush.bf16.msra.mxu0 0
    %616 = vmatpush.bf16.msra.mxu0 0
    %617 = vmatpush.bf16.msra.mxu0 0
    %618 = vmatpush.bf16.msra.mxu0 0
    %619 = vmatpush.bf16.msra.mxu0 0
    %620 = vmatpush.bf16.msra.mxu0 %v611
    %621 = vmatmul.bf16.gmra.mxu0 %v608
    %v622 = vpop.f32.mrf.mxu0
    %v623 = vadd.f32 0.0, %v622
    %v624 = vpop.f32.mrf.mxu0
    %625 = vdwg.mxu0
    %626 = vrot.lane.b32.xlu0 %v206, 40
    %v627 = vpop.permute.xlu0 %626
    %v629 = vsel %vm184, %v604, 0
    %v632 = vsel %vm261, %v627, 0
    %634 = vmatpush.bf16.msra.mxu0 0
    %635 = vmatpush.bf16.msra.mxu0 0
    %636 = vmatpush.bf16.msra.mxu0 0
    %637 = vmatpush.bf16.msra.mxu0 0
    %638 = vmatpush.bf16.msra.mxu0 0
    %639 = vmatpush.bf16.msra.mxu0 0
    %640 = vmatpush.bf16.msra.mxu0 0
    %641 = vmatpush.bf16.msra.mxu0 %v632
    %642 = vmatmul.bf16.gmra.mxu0 %v629
    %v643 = vpop.f32.mrf.mxu0
    %v644 = vadd.f32 0.0, %v643
    %v645 = vpop.f32.mrf.mxu0
    %646 = vdwg.mxu0
    %649 = vrot.lane.b32.xlu0 %v395, 8
    %v650 = vpop.permute.xlu0 %649
    %651 = vrot.lane.b32.xlu0 %v416, 8
    %v652 = vpop.permute.xlu0 %651
    %657 = vrot.lane.b32.xlu0 %v509, 16
    %v658 = vpop.permute.xlu0 %657
    %659 = vrot.lane.b32.xlu0 %v530, 16
    %v660 = vpop.permute.xlu0 %659
    %665 = vrot.lane.b32.xlu0 %v623, 24
    %v666 = vpop.permute.xlu0 %665
    %667 = vrot.lane.b32.xlu0 %v644, 24
    %v668 = vpop.permute.xlu0 %667
    %v671 = vsel %vm184, %v275, %v650
    %v672 = vsel %vm184, %v296, %v652
    %vm673 = vcmask 130048
    %v674 = vsel %vm673, %v671, %v658
    %v675 = vsel %vm673, %v672, %v660
    %vm676 = vcmask 195584
    %v677 = vsel %vm676, %v674, %v666
    %v678 = vsel %vm676, %v675, %v668
    %v679 = vpack.c.bf16 %v678, %v677
    %v680 = vld [vmem:[%s6] sm:$0xf]
    %v681 = vld [vmem:[%s6 + $0x4] sm:$0xf]
    %v682 = vld [vmem:[%s6 + $0x8] sm:$0xf]
    %v683 = vld [vmem:[%s6 + $0xc] sm:$0xf]
    %v684 = vld [vmem:[%s7] sm:$0x1]
    %v686 = vperm.slane %v684, 0
    %v692 = vunpack.c.l.b16 %v680
    %v693 = vunpack.c.l.b16 %v681
    %v694 = vunpack.c.l.b16 %v682
    %v695 = vunpack.c.l.b16 %v683
    %v696 = vpack.c.b16 %v693, %v692
    %v697 = vpack.c.b16 %v695, %v694
    %v701 = vsel %vm73, %v679, 0
    %703 = vmatpush.bf16.msra.mxu0 0
    %704 = vmatpush.bf16.msra.mxu0 0
    %705 = vmatpush.bf16.msra.mxu0 0
    %706 = vmatpush.bf16.msra.mxu0 0
    %707 = vmatpush.bf16.msra.mxu0 0
    %708 = vmatpush.bf16.msra.mxu0 0
    %709 = vmatpush.bf16.msra.mxu0 %v697
    %710 = vmatpush.bf16.msra.mxu0 %v696
    %711 = vmatmul.bf16.gmra.mxu0 %v701
    %v712 = vpop.f32.mrf.mxu0
    %v713 = vadd.f32 %v686, %v712
    %v714 = vpop.f32.mrf.mxu0
    %v715 = vadd.f32 %v686, %v714
    %716 = vdwg.mxu0
    %v717 = vadd.f32 %v64, %v713
    %v718 = vadd.f32 %v65, %v715
    %v719 = vld [vmem:[%s8] sm:$0x1]
    %v720 = vld [vmem:[%s9] sm:$0x1]
    %v721 = vsel %vm73, %v717, 0.0
    %722 = vadd.xlane.f32.xlu0 %v721
    %v723 = vpop.xlane.xlu0 %722
    %v724 = vsel %vm73, %v718, 0.0
    %725 = vadd.xlane.f32.xlu0 %v724
    %v726 = vpop.xlane.xlu0 %725
    %v727 = vmul.f32 %v723, %v86
    %v728 = vmul.f32 %v726, %v86
    %v729 = vsub.f32 %v717, %v727
    %v730 = vsub.f32 %v718, %v728
    %v731 = vmul.f32 %v729, %v729
    %v732 = vmul.f32 %v730, %v730
    %v733 = vsel %vm73, %v731, 0.0
    %734 = vadd.xlane.f32.xlu0 %v733
    %v735 = vpop.xlane.xlu0 %734
    %v736 = vsel %vm73, %v732, 0.0
    %737 = vadd.xlane.f32.xlu0 %v736
    %v738 = vpop.xlane.xlu0 %737
    %v739 = vmul.f32 %v735, %v86
    %v740 = vmul.f32 %v738, %v86
    %v741 = vadd.f32 %v739, 1e-05
    %v742 = vadd.f32 %v740, 1e-05
    %v743 = vrsqrt.pop %v741
    %v744 = vmul.f32 %v743, %v741
    %v745 = vmul.f32 %v744, %v743
    %v746 = vmul.f32 0.5, %v745
    %v747 = vsub.f32 1.5, %v746
    %v748 = vmul.f32 %v743, %v747
    %vm749 = vweird.f32 %v741
    %vm750 = vweird.f32 %v743
    %vm751 = vmor %vm749, %vm750
    %v752 = vsel %vm751, %v743, %v748
    %v753 = vrsqrt.pop %v742
    %v754 = vmul.f32 %v753, %v742
    %v755 = vmul.f32 %v754, %v753
    %v756 = vmul.f32 0.5, %v755
    %v757 = vsub.f32 1.5, %v756
    %v758 = vmul.f32 %v753, %v757
    %vm759 = vweird.f32 %v742
    %vm760 = vweird.f32 %v753
    %vm761 = vmor %vm759, %vm760
    %v762 = vsel %vm761, %v753, %v758
    %v763 = vmul.f32 %v729, %v752
    %v764 = vmul.f32 %v730, %v762
    %v766 = vperm.slane %v719, 0
    %v768 = vmul.f32 %v763, %v766
    %v769 = vmul.f32 %v764, %v766
    %v771 = vperm.slane %v720, 0
    %v773 = vadd.f32 %v768, %v771
    %v774 = vadd.f32 %v769, %v771
    %v775 = vpack.c.bf16 %v774, %v773
    %v776 = vld [vmem:[%s10] sm:$0xf]
    %v777 = vld [vmem:[%s10 + $0x4] sm:$0xf]
    %v778 = vld [vmem:[%s10 + $0x8] sm:$0xf]
    %v779 = vld [vmem:[%s10 + $0xc] sm:$0xf]
    %v780 = vld [vmem:[%s11] sm:$0x1]
    %v782 = vperm.slane %v780, 0
    %v788 = vunpack.c.l.b16 %v776
    %v789 = vunpack.c.l.b16 %v777
    %v790 = vunpack.c.l.b16 %v778
    %v791 = vunpack.c.l.b16 %v779
    %v792 = vpack.c.b16 %v789, %v788
    %v793 = vpack.c.b16 %v791, %v790
    %v797 = vsel %vm73, %v775, 0
    %799 = vmatpush.bf16.msra.mxu0 0
    %800 = vmatpush.bf16.msra.mxu0 0
    %801 = vmatpush.bf16.msra.mxu0 0
    %802 = vmatpush.bf16.msra.mxu0 0
    %803 = vmatpush.bf16.msra.mxu0 0
    %804 = vmatpush.bf16.msra.mxu0 0
    %805 = vmatpush.bf16.msra.mxu0 %v793
    %806 = vmatpush.bf16.msra.mxu0 %v792
    %807 = vmatmul.bf16.gmra.mxu0 %v797
    %v808 = vpop.f32.mrf.mxu0
    %v809 = vadd.f32 %v782, %v808
    %v810 = vpop.f32.mrf.mxu0
    %v811 = vadd.f32 %v782, %v810
    %812 = vdwg.mxu0
    %v813 = vmul.f32 %v809, 1.702
    %v814 = vmul.f32 %v811, 1.702
    %v815 = vxor.u32 %v813, 2147483648
    %v816 = vxor.u32 %v814, 2147483648
    %v817 = vmul.f32 %v815, 1.442695
    %v818 = vpow.pop %v817
    %v819 = vmul.f32 %v816, 1.442695
    %v820 = vpow.pop %v819
    %v821 = vadd.f32 %v818, 1.0
    %v822 = vadd.f32 %v820, 1.0
    %v823 = vrcp.pop %v821
    %v824 = vmul.f32 %v821, %v823
    %v825 = vsub.f32 1.0, %v824
    %v826 = vmul.f32 %v823, %v825
    %v827 = vadd.f32 %v823, %v826
    %vm828 = vweird.f32 %v821
    %vm829 = vweird.f32 %v823
    %vm830 = vmor %vm828, %vm829
    %v831 = vsel %vm830, %v823, %v827
    %v832 = vand.u32 2147483647, %v821
    %vm833 = vcmp.eq.f32.partialorder %v832, 8.507059e+37
    %v834 = vand.u32 %v821, 2147483648
    %v835 = vor.u32 1.1754944e-38, %v834
    %v836 = vsel %vm833, %v835, %v831
    %v837 = vmul.f32 1.0, %v836
    %v838 = vrcp.pop %v822
    %v839 = vmul.f32 %v822, %v838
    %v840 = vsub.f32 1.0, %v839
    %v841 = vmul.f32 %v838, %v840
    %v842 = vadd.f32 %v838, %v841
    %vm843 = vweird.f32 %v822
    %vm844 = vweird.f32 %v838
    %vm845 = vmor %vm843, %vm844
    %v846 = vsel %vm845, %v838, %v842
    %v847 = vand.u32 2147483647, %v822
    %vm848 = vcmp.eq.f32.partialorder %v847, 8.507059e+37
    %v849 = vand.u32 %v822, 2147483648
    %v850 = vor.u32 1.1754944e-38, %v849
    %v851 = vsel %vm848, %v850, %v846
    %v852 = vmul.f32 1.0, %v851
    %v853 = vmul.f32 %v809, %v837
    %v854 = vmul.f32 %v811, %v852
    %v855 = vpack.c.bf16 %v854, %v853
    %v856 = vld [vmem:[%s12] sm:$0xf]
    %v857 = vld [vmem:[%s12 + $0x4] sm:$0xf]
    %v858 = vld [vmem:[%s12 + $0x8] sm:$0xf]
    %v859 = vld [vmem:[%s12 + $0xc] sm:$0xf]
    %v860 = vld [vmem:[%s12 + $0x10] sm:$0xf]
    %v861 = vld [vmem:[%s12 + $0x14] sm:$0xf]
    %v862 = vld [vmem:[%s12 + $0x18] sm:$0xf]
    %v863 = vld [vmem:[%s12 + $0x1c] sm:$0xf]
    %v864 = vld [vmem:[%s12 + $0x20] sm:$0xf]
    %v865 = vld [vmem:[%s12 + $0x24] sm:$0xf]
    %v866 = vld [vmem:[%s12 + $0x28] sm:$0xf]
    %v867 = vld [vmem:[%s12 + $0x2c] sm:$0xf]
    %v868 = vld [vmem:[%s12 + $0x30] sm:$0xf]
    %v869 = vld [vmem:[%s12 + $0x34] sm:$0xf]
    %v870 = vld [vmem:[%s12 + $0x38] sm:$0xf]
    %v871 = vld [vmem:[%s12 + $0x3c] sm:$0xf]
    %v872 = vld [vmem:[%s13] sm:$0x1]
    %v874 = vperm.slane %v872, 0
    %v892 = vunpack.c.l.b16 %v856
    %v893 = vunpack.c.l.b16 %v857
    %v894 = vunpack.c.l.b16 %v858
    %v895 = vunpack.c.l.b16 %v859
    %v896 = vunpack.c.l.b16 %v860
    %v897 = vunpack.c.l.b16 %v861
    %v898 = vunpack.c.l.b16 %v862
    %v899 = vunpack.c.l.b16 %v863
    %v900 = vunpack.c.l.b16 %v864
    %v901 = vunpack.c.l.b16 %v865
    %v902 = vunpack.c.l.b16 %v866
    %v903 = vunpack.c.l.b16 %v867
    %v904 = vunpack.c.l.b16 %v868
    %v905 = vunpack.c.l.b16 %v869
    %v906 = vunpack.c.l.b16 %v870
    %v907 = vunpack.c.l.b16 %v871
    %v908 = vpack.c.b16 %v893, %v892
    %v909 = vpack.c.b16 %v895, %v894
    %v910 = vpack.c.b16 %v897, %v896
    %v911 = vpack.c.b16 %v899, %v898
    %v912 = vpack.c.b16 %v901, %v900
    %v913 = vpack.c.b16 %v903, %v902
    %v914 = vpack.c.b16 %v905, %v904
    %v915 = vpack.c.b16 %v907, %v906
    %924 = vmatpush.bf16.msra.mxu0 %v915
    %925 = vmatpush.bf16.msra.mxu0 %v914
    %926 = vmatpush.bf16.msra.mxu0 %v913
    %927 = vmatpush.bf16.msra.mxu0 %v912
    %928 = vmatpush.bf16.msra.mxu0 %v911
    %929 = vmatpush.bf16.msra.mxu0 %v910
    %930 = vmatpush.bf16.msra.mxu0 %v909
    %931 = vmatpush.bf16.msra.mxu0 %v908
    %932 = vmatmul.bf16.gmra.mxu0 %v855
    %v933 = vpop.f32.mrf.mxu0
    %v934 = vadd.f32 %v874, %v933
    %v935 = vpop.f32.mrf.mxu0
    %v936 = vadd.f32 %v874, %v935
    %937 = vdwg.mxu0
    %v938 = vadd.f32 %v717, %v934
    %v939 = vadd.f32 %v718, %v936
    %s940 = scalar_lea.vmem %s2, 1
    %v941 = vld [vmem:[%s940] sm:$0x1]
    %s942 = scalar_lea.vmem %s3, 1
    %v943 = vld [vmem:[%s942] sm:$0x1]
    %v944 = vsel %vm73, %v938, 0.0
    %945 = vadd.xlane.f32.xlu0 %v944
    %v946 = vpop.xlane.xlu0 %945
    %v947 = vsel %vm73, %v939, 0.0
    %948 = vadd.xlane.f32.xlu0 %v947
    %v949 = vpop.xlane.xlu0 %948
    %v950 = vmul.f32 %v946, %v86
    %v951 = vmul.f32 %v949, %v86
    %v952 = vsub.f32 %v938, %v950
    %v953 = vsub.f32 %v939, %v951
    %v954 = vmul.f32 %v952, %v952
    %v955 = vmul.f32 %v953, %v953
    %v956 = vsel %vm73, %v954, 0.0
    %957 = vadd.xlane.f32.xlu0 %v956
    %v958 = vpop.xlane.xlu0 %957
    %v959 = vsel %vm73, %v955, 0.0
    %960 = vadd.xlane.f32.xlu0 %v959
    %v961 = vpop.xlane.xlu0 %960
    %v962 = vmul.f32 %v958, %v86
    %v963 = vmul.f32 %v961, %v86
    %v964 = vadd.f32 %v962, 1e-05
    %v965 = vadd.f32 %v963, 1e-05
    %v966 = vrsqrt.pop %v964
    %v967 = vmul.f32 %v966, %v964
    %v968 = vmul.f32 %v967, %v966
    %v969 = vmul.f32 0.5, %v968
    %v970 = vsub.f32 1.5, %v969
    %v971 = vmul.f32 %v966, %v970
    %vm972 = vweird.f32 %v964
    %vm973 = vweird.f32 %v966
    %vm974 = vmor %vm972, %vm973
    %v975 = vsel %vm974, %v966, %v971
    %v976 = vrsqrt.pop %v965
    %v977 = vmul.f32 %v976, %v965
    %v978 = vmul.f32 %v977, %v976
    %v979 = vmul.f32 0.5, %v978
    %v980 = vsub.f32 1.5, %v979
    %v981 = vmul.f32 %v976, %v980
    %vm982 = vweird.f32 %v965
    %vm983 = vweird.f32 %v976
    %vm984 = vmor %vm982, %vm983
    %v985 = vsel %vm984, %v976, %v981
    %v986 = vmul.f32 %v952, %v975
    %v987 = vmul.f32 %v953, %v985
    %v989 = vperm.slane %v941, 0
    %v991 = vmul.f32 %v986, %v989
    %v992 = vmul.f32 %v987, %v989
    %v994 = vperm.slane %v943, 0
    %v996 = vadd.f32 %v991, %v994
    %v997 = vadd.f32 %v992, %v994
    %v998 = vpack.c.bf16 %v997, %v996
    %s999 = scalar_lea.vmem %s4, 16
    %v1000 = vld [vmem:[%s999] sm:$0xf]
    %v1001 = vld [vmem:[%s999 + $0x4] sm:$0xf]
    %v1002 = vld [vmem:[%s999 + $0x8] sm:$0xf]
    %v1003 = vld [vmem:[%s999 + $0xc] sm:$0xf]
    %s1004 = scalar_lea.vmem %s5, 1
    %v1005 = vld [vmem:[%s1004] sm:$0x1]
    %v1007 = vperm.slane %v1005, 0
    %v1013 = vunpack.c.l.b16 %v1000
    %v1014 = vunpack.c.l.b16 %v1001
    %v1015 = vunpack.c.l.b16 %v1002
    %v1016 = vunpack.c.l.b16 %v1003
    %v1017 = vpack.c.b16 %v1014, %v1013
    %v1018 = vpack.c.b16 %v1016, %v1015
    %v1022 = vsel %vm73, %v998, 0
    %1024 = vmatpush.bf16.msra.mxu0 0
    %1025 = vmatpush.bf16.msra.mxu0 0
    %1026 = vmatpush.bf16.msra.mxu0 0
    %1027 = vmatpush.bf16.msra.mxu0 0
    %1028 = vmatpush.bf16.msra.mxu0 0
    %1029 = vmatpush.bf16.msra.mxu0 0
    %1030 = vmatpush.bf16.msra.mxu0 %v1018
    %1031 = vmatpush.bf16.msra.mxu0 %v1017
    %1032 = vmatmul.bf16.gmra.mxu0 %v1022
    %v1033 = vpop.f32.mrf.mxu0
    %v1034 = vadd.f32 %v1007, %v1033
    %v1035 = vpop.f32.mrf.mxu0
    %v1036 = vadd.f32 %v1007, %v1035
    %1037 = vdwg.mxu0
    %v1038 = vmul.f32 %v1034, 0.35355338
    %v1039 = vmul.f32 %v1036, 0.35355338
    %v1040 = vpack.c.bf16 %v1038, %v1038
    %v1041 = vpack.c.bf16 %v1039, %v1039
    %v1042 = vpack.c.bf16 %v1034, %v1034
    %v1043 = vpack.c.bf16 %v1036, %v1036
    %v1045 = vunpack.c.l.b16 %v1042
    %v1046 = vpack.c.b16 %v1045, %v1045
    %1047 = vrot.lane.b32.xlu0 %v1046, 96
    %v1048 = vpop.permute.xlu0 %1047
    %v1050 = vsel %vm184, %v1040, 0
    %v1053 = vsel %vm184, %v1048, 0
    %1055 = vmatpush.bf16.xpose.msra.mxu0 0
    %1056 = vmatpush.bf16.xpose.msra.mxu0 0
    %1057 = vmatpush.bf16.xpose.msra.mxu0 0
    %1058 = vmatpush.bf16.xpose.msra.mxu0 0
    %1059 = vmatpush.bf16.xpose.msra.mxu0 0
    %1060 = vmatpush.bf16.xpose.msra.mxu0 0
    %1061 = vmatpush.bf16.xpose.msra.mxu0 0
    %1062 = vmatpush.bf16.xpose.msra.mxu0 %v1053
    %1063 = vmatmul.bf16.gmra.mxu0 %v1050
    %v1064 = vpop.f32.mrf.mxu0
    %v1065 = vadd.f32 0.0, %v1064
    %v1066 = vpop.f32.mrf.mxu0
    %1067 = vdwg.mxu0
    %v1069 = vunpack.c.l.b16 %v1043
    %v1070 = vpack.c.b16 %v1069, %v1069
    %1071 = vrot.lane.b32.xlu0 %v1070, 96
    %v1072 = vpop.permute.xlu0 %1071
    %v1074 = vsel %vm184, %v1041, 0
    %v1077 = vsel %vm184, %v1072, 0
    %1079 = vmatpush.bf16.xpose.msra.mxu0 0
    %1080 = vmatpush.bf16.xpose.msra.mxu0 0
    %1081 = vmatpush.bf16.xpose.msra.mxu0 0
    %1082 = vmatpush.bf16.xpose.msra.mxu0 0
    %1083 = vmatpush.bf16.xpose.msra.mxu0 0
    %1084 = vmatpush.bf16.xpose.msra.mxu0 0
    %1085 = vmatpush.bf16.xpose.msra.mxu0 0
    %1086 = vmatpush.bf16.xpose.msra.mxu0 %v1077
    %1087 = vmatmul.bf16.gmra.mxu0 %v1074
    %v1088 = vpop.f32.mrf.mxu0
    %v1089 = vadd.f32 0.0, %v1088
    %v1090 = vpop.f32.mrf.mxu0
    %1091 = vdwg.mxu0
    %v1092 = vsel %vm229, %v1065, -1e+30
    %v1093 = vsel %vm229, %v1089, -1e+30
    %v1094 = vsel %vm184, %v1092, -inf
    %1095 = vmax.xlane.f32.xlu0 %v1094
    %v1096 = vpop.xlane.xlu0 %1095
    %v1097 = vsel %vm184, %v1093, -inf
    %1098 = vmax.xlane.f32.xlu0 %v1097
    %v1099 = vpop.xlane.xlu0 %1098
    %v1100 = vsub.f32 %v1092, %v1096
    %v1101 = vsub.f32 %v1093, %v1099
    %v1102 = vmul.f32 %v1100, 1.442695
    %v1103 = vpow.pop %v1102
    %v1104 = vmul.f32 %v1101, 1.442695
    %v1105 = vpow.pop %v1104
    %v1106 = vsel %vm184, %v1103, 0.0
    %1107 = vadd.xlane.f32.xlu0 %v1106
    %v1108 = vpop.xlane.xlu0 %1107
    %v1109 = vsel %vm184, %v1105, 0.0
    %1110 = vadd.xlane.f32.xlu0 %v1109
    %v1111 = vpop.xlane.xlu0 %1110
    %v1112 = vrcp.pop %v1108
    %v1113 = vrcp.pop %v1111
    %v1114 = vmul.f32 %v1103, %v1112
    %v1115 = vmul.f32 %v1105, %v1113
    %v1116 = vpack.c.bf16 %v1114, %v1114
    %v1117 = vpack.c.bf16 %v1115, %v1115
    %1118 = vrot.lane.b32.xlu0 %v1046, 64
    %v1119 = vpop.permute.xlu0 %1118
    %v1121 = vsel %vm184, %v1116, 0
    %v1124 = vsel %vm261, %v1119, 0
    %1126 = vmatpush.bf16.msra.mxu0 0
    %1127 = vmatpush.bf16.msra.mxu0 0
    %1128 = vmatpush.bf16.msra.mxu0 0
    %1129 = vmatpush.bf16.msra.mxu0 0
    %1130 = vmatpush.bf16.msra.mxu0 0
    %1131 = vmatpush.bf16.msra.mxu0 0
    %1132 = vmatpush.bf16.msra.mxu0 0
    %1133 = vmatpush.bf16.msra.mxu0 %v1124
    %1134 = vmatmul.bf16.gmra.mxu0 %v1121
    %v1135 = vpop.f32.mrf.mxu0
    %v1136 = vadd.f32 0.0, %v1135
    %v1137 = vpop.f32.mrf.mxu0
    %1138 = vdwg.mxu0
    %1139 = vrot.lane.b32.xlu0 %v1070, 64
    %v1140 = vpop.permute.xlu0 %1139
    %v1142 = vsel %vm184, %v1117, 0
    %v1145 = vsel %vm261, %v1140, 0
    %1147 = vmatpush.bf16.msra.mxu0 0
    %1148 = vmatpush.bf16.msra.mxu0 0
    %1149 = vmatpush.bf16.msra.mxu0 0
    %1150 = vmatpush.bf16.msra.mxu0 0
    %1151 = vmatpush.bf16.msra.mxu0 0
    %1152 = vmatpush.bf16.msra.mxu0 0
    %1153 = vmatpush.bf16.msra.mxu0 0
    %1154 = vmatpush.bf16.msra.mxu0 %v1145
    %1155 = vmatmul.bf16.gmra.mxu0 %v1142
    %v1156 = vpop.f32.mrf.mxu0
    %v1157 = vadd.f32 0.0, %v1156
    %v1158 = vpop.f32.mrf.mxu0
    %1159 = vdwg.mxu0
    %v1161 = vunpack.c.l.b16 %v1040
    %v1162 = vpack.c.b16 %v1161, %v1161
    %1163 = vrot.lane.b32.xlu0 %v1162, 120
    %v1164 = vpop.permute.xlu0 %1163
    %1165 = vrot.lane.b32.xlu0 %v1046, 88
    %v1166 = vpop.permute.xlu0 %1165
    %v1168 = vsel %vm184, %v1164, 0
    %v1171 = vsel %vm184, %v1166, 0
    %1173 = vmatpush.bf16.xpose.msra.mxu0 0
    %1174 = vmatpush.bf16.xpose.msra.mxu0 0
    %1175 = vmatpush.bf16.xpose.msra.mxu0 0
    %1176 = vmatpush.bf16.xpose.msra.mxu0 0
    %1177 = vmatpush.bf16.xpose.msra.mxu0 0
    %1178 = vmatpush.bf16.xpose.msra.mxu0 0
    %1179 = vmatpush.bf16.xpose.msra.mxu0 0
    %1180 = vmatpush.bf16.xpose.msra.mxu0 %v1171
    %1181 = vmatmul.bf16.gmra.mxu0 %v1168
    %v1182 = vpop.f32.mrf.mxu0
    %v1183 = vadd.f32 0.0, %v1182
    %v1184 = vpop.f32.mrf.mxu0
    %1185 = vdwg.mxu0
    %v1187 = vunpack.c.l.b16 %v1041
    %v1188 = vpack.c.b16 %v1187, %v1187
    %1189 = vrot.lane.b32.xlu0 %v1188, 120
    %v1190 = vpop.permute.xlu0 %1189
    %1191 = vrot.lane.b32.xlu0 %v1070, 88
    %v1192 = vpop.permute.xlu0 %1191
    %v1194 = vsel %vm184, %v1190, 0
    %v1197 = vsel %vm184, %v1192, 0
    %1199 = vmatpush.bf16.xpose.msra.mxu0 0
    %1200 = vmatpush.bf16.xpose.msra.mxu0 0
    %1201 = vmatpush.bf16.xpose.msra.mxu0 0
    %1202 = vmatpush.bf16.xpose.msra.mxu0 0
    %1203 = vmatpush.bf16.xpose.msra.mxu0 0
    %1204 = vmatpush.bf16.xpose.msra.mxu0 0
    %1205 = vmatpush.bf16.xpose.msra.mxu0 0
    %1206 = vmatpush.bf16.xpose.msra.mxu0 %v1197
    %1207 = vmatmul.bf16.gmra.mxu0 %v1194
    %v1208 = vpop.f32.mrf.mxu0
    %v1209 = vadd.f32 0.0, %v1208
    %v1210 = vpop.f32.mrf.mxu0
    %1211 = vdwg.mxu0
    %v1212 = vsel %vm229, %v1183, -1e+30
    %v1213 = vsel %vm229, %v1209, -1e+30
    %v1214 = vsel %vm184, %v1212, -inf
    %1215 = vmax.xlane.f32.xlu0 %v1214
    %v1216 = vpop.xlane.xlu0 %1215
    %v1217 = vsel %vm184, %v1213, -inf
    %1218 = vmax.xlane.f32.xlu0 %v1217
    %v1219 = vpop.xlane.xlu0 %1218
    %v1220 = vsub.f32 %v1212, %v1216
    %v1221 = vsub.f32 %v1213, %v1219
    %v1222 = vmul.f32 %v1220, 1.442695
    %v1223 = vpow.pop %v1222
    %v1224 = vmul.f32 %v1221, 1.442695
    %v1225 = vpow.pop %v1224
    %v1226 = vsel %vm184, %v1223, 0.0
    %1227 = vadd.xlane.f32.xlu0 %v1226
    %v1228 = vpop.xlane.xlu0 %1227
    %v1229 = vsel %vm184, %v1225, 0.0
    %1230 = vadd.xlane.f32.xlu0 %v1229
    %v1231 = vpop.xlane.xlu0 %1230
    %v1232 = vrcp.pop %v1228
    %v1233 = vrcp.pop %v1231
    %v1234 = vmul.f32 %v1223, %v1232
    %v1235 = vmul.f32 %v1225, %v1233
    %v1236 = vpack.c.bf16 %v1234, %v1234
    %v1237 = vpack.c.bf16 %v1235, %v1235
    %1238 = vrot.lane.b32.xlu0 %v1046, 56
    %v1239 = vpop.permute.xlu0 %1238
    %v1241 = vsel %vm184, %v1236, 0
    %v1244 = vsel %vm261, %v1239, 0
    %1246 = vmatpush.bf16.msra.mxu0 0
    %1247 = vmatpush.bf16.msra.mxu0 0
    %1248 = vmatpush.bf16.msra.mxu0 0
    %1249 = vmatpush.bf16.msra.mxu0 0
    %1250 = vmatpush.bf16.msra.mxu0 0
    %1251 = vmatpush.bf16.msra.mxu0 0
    %1252 = vmatpush.bf16.msra.mxu0 0
    %1253 = vmatpush.bf16.msra.mxu0 %v1244
    %1254 = vmatmul.bf16.gmra.mxu0 %v1241
    %v1255 = vpop.f32.mrf.mxu0
    %v1256 = vadd.f32 0.0, %v1255
    %v1257 = vpop.f32.mrf.mxu0
    %1258 = vdwg.mxu0
    %1259 = vrot.lane.b32.xlu0 %v1070, 56
    %v1260 = vpop.permute.xlu0 %1259
    %v1262 = vsel %vm184, %v1237, 0
    %v1265 = vsel %vm261, %v1260, 0
    %1267 = vmatpush.bf16.msra.mxu0 0
    %1268 = vmatpush.bf16.msra.mxu0 0
    %1269 = vmatpush.bf16.msra.mxu0 0
    %1270 = vmatpush.bf16.msra.mxu0 0
    %1271 = vmatpush.bf16.msra.mxu0 0
    %1272 = vmatpush.bf16.msra.mxu0 0
    %1273 = vmatpush.bf16.msra.mxu0 0
    %1274 = vmatpush.bf16.msra.mxu0 %v1265
    %1275 = vmatmul.bf16.gmra.mxu0 %v1262
    %v1276 = vpop.f32.mrf.mxu0
    %v1277 = vadd.f32 0.0, %v1276
    %v1278 = vpop.f32.mrf.mxu0
    %1279 = vdwg.mxu0
    %1280 = vrot.lane.b32.xlu0 %v1162, 112
    %v1281 = vpop.permute.xlu0 %1280
    %1282 = vrot.lane.b32.xlu0 %v1046, 80
    %v1283 = vpop.permute.xlu0 %1282
    %v1285 = vsel %vm184, %v1281, 0
    %v1288 = vsel %vm184, %v1283, 0
    %1290 = vmatpush.bf16.xpose.msra.mxu0 0
    %1291 = vmatpush.bf16.xpose.msra.mxu0 0
    %1292 = vmatpush.bf16.xpose.msra.mxu0 0
    %1293 = vmatpush.bf16.xpose.msra.mxu0 0
    %1294 = vmatpush.bf16.xpose.msra.mxu0 0
    %1295 = vmatpush.bf16.xpose.msra.mxu0 0
    %1296 = vmatpush.bf16.xpose.msra.mxu0 0
    %1297 = vmatpush.bf16.xpose.msra.mxu0 %v1288
    %1298 = vmatmul.bf16.gmra.mxu0 %v1285
    %v1299 = vpop.f32.mrf.mxu0
    %v1300 = vadd.f32 0.0, %v1299
    %v1301 = vpop.f32.mrf.mxu0
    %1302 = vdwg.mxu0
    %1303 = vrot.lane.b32.xlu0 %v1188, 112
    %v1304 = vpop.permute.xlu0 %1303
    %1305 = vrot.lane.b32.xlu0 %v1070, 80
    %v1306 = vpop.permute.xlu0 %1305
    %v1308 = vsel %vm184, %v1304, 0
    %v1311 = vsel %vm184, %v1306, 0
    %1313 = vmatpush.bf16.xpose.msra.mxu0 0
    %1314 = vmatpush.bf16.xpose.msra.mxu0 0
    %1315 = vmatpush.bf16.xpose.msra.mxu0 0
    %1316 = vmatpush.bf16.xpose.msra.mxu0 0
    %1317 = vmatpush.bf16.xpose.msra.mxu0 0
    %1318 = vmatpush.bf16.xpose.msra.mxu0 0
    %1319 = vmatpush.bf16.xpose.msra.mxu0 0
    %1320 = vmatpush.bf16.xpose.msra.mxu0 %v1311
    %1321 = vmatmul.bf16.gmra.mxu0 %v1308
    %v1322 = vpop.f32.mrf.mxu0
    %v1323 = vadd.f32 0.0, %v1322
    %v1324 = vpop.f32.mrf.mxu0
    %1325 = vdwg.mxu0
    %v1326 = vsel %vm229, %v1300, -1e+30
    %v1327 = vsel %vm229, %v1323, -1e+30
    %v1328 = vsel %vm184, %v1326, -inf
    %1329 = vmax.xlane.f32.xlu0 %v1328
    %v1330 = vpop.xlane.xlu0 %1329
    %v1331 = vsel %vm184, %v1327, -inf
    %1332 = vmax.xlane.f32.xlu0 %v1331
    %v1333 = vpop.xlane.xlu0 %1332
    %v1334 = vsub.f32 %v1326, %v1330
    %v1335 = vsub.f32 %v1327, %v1333
    %v1336 = vmul.f32 %v1334, 1.442695
    %v1337 = vpow.pop %v1336
    %v1338 = vmul.f32 %v1335, 1.442695
    %v1339 = vpow.pop %v1338
    %v1340 = vsel %vm184, %v1337, 0.0
    %1341 = vadd.xlane.f32.xlu0 %v1340
    %v1342 = vpop.xlane.xlu0 %1341
    %v1343 = vsel %vm184, %v1339, 0.0
    %1344 = vadd.xlane.f32.xlu0 %v1343
    %v1345 = vpop.xlane.xlu0 %1344
    %v1346 = vrcp.pop %v1342
    %v1347 = vrcp.pop %v1345
    %v1348 = vmul.f32 %v1337, %v1346
    %v1349 = vmul.f32 %v1339, %v1347
    %v1350 = vpack.c.bf16 %v1348, %v1348
    %v1351 = vpack.c.bf16 %v1349, %v1349
    %1352 = vrot.lane.b32.xlu0 %v1046, 48
    %v1353 = vpop.permute.xlu0 %1352
    %v1355 = vsel %vm184, %v1350, 0
    %v1358 = vsel %vm261, %v1353, 0
    %1360 = vmatpush.bf16.msra.mxu0 0
    %1361 = vmatpush.bf16.msra.mxu0 0
    %1362 = vmatpush.bf16.msra.mxu0 0
    %1363 = vmatpush.bf16.msra.mxu0 0
    %1364 = vmatpush.bf16.msra.mxu0 0
    %1365 = vmatpush.bf16.msra.mxu0 0
    %1366 = vmatpush.bf16.msra.mxu0 0
    %1367 = vmatpush.bf16.msra.mxu0 %v1358
    %1368 = vmatmul.bf16.gmra.mxu0 %v1355
    %v1369 = vpop.f32.mrf.mxu0
    %v1370 = vadd.f32 0.0, %v1369
    %v1371 = vpop.f32.mrf.mxu0
    %1372 = vdwg.mxu0
    %1373 = vrot.lane.b32.xlu0 %v1070, 48
    %v1374 = vpop.permute.xlu0 %1373
    %v1376 = vsel %vm184, %v1351, 0
    %v1379 = vsel %vm261, %v1374, 0
    %1381 = vmatpush.bf16.msra.mxu0 0
    %1382 = vmatpush.bf16.msra.mxu0 0
    %1383 = vmatpush.bf16.msra.mxu0 0
    %1384 = vmatpush.bf16.msra.mxu0 0
    %1385 = vmatpush.bf16.msra.mxu0 0
    %1386 = vmatpush.bf16.msra.mxu0 0
    %1387 = vmatpush.bf16.msra.mxu0 0
    %1388 = vmatpush.bf16.msra.mxu0 %v1379
    %1389 = vmatmul.bf16.gmra.mxu0 %v1376
    %v1390 = vpop.f32.mrf.mxu0
    %v1391 = vadd.f32 0.0, %v1390
    %v1392 = vpop.f32.mrf.mxu0
    %1393 = vdwg.mxu0
    %1394 = vrot.lane.b32.xlu0 %v1162, 104
    %v1395 = vpop.permute.xlu0 %1394
    %1396 = vrot.lane.b32.xlu0 %v1046, 72
    %v1397 = vpop.permute.xlu0 %1396
    %v1399 = vsel %vm184, %v1395, 0
    %v1402 = vsel %vm184, %v1397, 0
    %1404 = vmatpush.bf16.xpose.msra.mxu0 0
    %1405 = vmatpush.bf16.xpose.msra.mxu0 0
    %1406 = vmatpush.bf16.xpose.msra.mxu0 0
    %1407 = vmatpush.bf16.xpose.msra.mxu0 0
    %1408 = vmatpush.bf16.xpose.msra.mxu0 0
    %1409 = vmatpush.bf16.xpose.msra.mxu0 0
    %1410 = vmatpush.bf16.xpose.msra.mxu0 0
    %1411 = vmatpush.bf16.xpose.msra.mxu0 %v1402
    %1412 = vmatmul.bf16.gmra.mxu0 %v1399
    %v1413 = vpop.f32.mrf.mxu0
    %v1414 = vadd.f32 0.0, %v1413
    %v1415 = vpop.f32.mrf.mxu0
    %1416 = vdwg.mxu0
    %1417 = vrot.lane.b32.xlu0 %v1188, 104
    %v1418 = vpop.permute.xlu0 %1417
    %1419 = vrot.lane.b32.xlu0 %v1070, 72
    %v1420 = vpop.permute.xlu0 %1419
    %v1422 = vsel %vm184, %v1418, 0
    %v1425 = vsel %vm184, %v1420, 0
    %1427 = vmatpush.bf16.xpose.msra.mxu0 0
    %1428 = vmatpush.bf16.xpose.msra.mxu0 0
    %1429 = vmatpush.bf16.xpose.msra.mxu0 0
    %1430 = vmatpush.bf16.xpose.msra.mxu0 0
    %1431 = vmatpush.bf16.xpose.msra.mxu0 0
    %1432 = vmatpush.bf16.xpose.msra.mxu0 0
    %1433 = vmatpush.bf16.xpose.msra.mxu0 0
    %1434 = vmatpush.bf16.xpose.msra.mxu0 %v1425
    %1435 = vmatmul.bf16.gmra.mxu0 %v1422
    %v1436 = vpop.f32.mrf.mxu0
    %v1437 = vadd.f32 0.0, %v1436
    %v1438 = vpop.f32.mrf.mxu0
    %1439 = vdwg.mxu0
    %v1440 = vsel %vm229, %v1414, -1e+30
    %v1441 = vsel %vm229, %v1437, -1e+30
    %v1442 = vsel %vm184, %v1440, -inf
    %1443 = vmax.xlane.f32.xlu0 %v1442
    %v1444 = vpop.xlane.xlu0 %1443
    %v1445 = vsel %vm184, %v1441, -inf
    %1446 = vmax.xlane.f32.xlu0 %v1445
    %v1447 = vpop.xlane.xlu0 %1446
    %v1448 = vsub.f32 %v1440, %v1444
    %v1449 = vsub.f32 %v1441, %v1447
    %v1450 = vmul.f32 %v1448, 1.442695
    %v1451 = vpow.pop %v1450
    %v1452 = vmul.f32 %v1449, 1.442695
    %v1453 = vpow.pop %v1452
    %v1454 = vsel %vm184, %v1451, 0.0
    %1455 = vadd.xlane.f32.xlu0 %v1454
    %v1456 = vpop.xlane.xlu0 %1455
    %v1457 = vsel %vm184, %v1453, 0.0
    %1458 = vadd.xlane.f32.xlu0 %v1457
    %v1459 = vpop.xlane.xlu0 %1458
    %v1460 = vrcp.pop %v1456
    %v1461 = vrcp.pop %v1459
    %v1462 = vmul.f32 %v1451, %v1460
    %v1463 = vmul.f32 %v1453, %v1461
    %v1464 = vpack.c.bf16 %v1462, %v1462
    %v1465 = vpack.c.bf16 %v1463, %v1463
    %1466 = vrot.lane.b32.xlu0 %v1046, 40
    %v1467 = vpop.permute.xlu0 %1466
    %v1469 = vsel %vm184, %v1464, 0
    %v1472 = vsel %vm261, %v1467, 0
    %1474 = vmatpush.bf16.msra.mxu0 0
    %1475 = vmatpush.bf16.msra.mxu0 0
    %1476 = vmatpush.bf16.msra.mxu0 0
    %1477 = vmatpush.bf16.msra.mxu0 0
    %1478 = vmatpush.bf16.msra.mxu0 0
    %1479 = vmatpush.bf16.msra.mxu0 0
    %1480 = vmatpush.bf16.msra.mxu0 0
    %1481 = vmatpush.bf16.msra.mxu0 %v1472
    %1482 = vmatmul.bf16.gmra.mxu0 %v1469
    %v1483 = vpop.f32.mrf.mxu0
    %v1484 = vadd.f32 0.0, %v1483
    %v1485 = vpop.f32.mrf.mxu0
    %1486 = vdwg.mxu0
    %1487 = vrot.lane.b32.xlu0 %v1070, 40
    %v1488 = vpop.permute.xlu0 %1487
    %v1490 = vsel %vm184, %v1465, 0
    %v1493 = vsel %vm261, %v1488, 0
    %1495 = vmatpush.bf16.msra.mxu0 0
    %1496 = vmatpush.bf16.msra.mxu0 0
    %1497 = vmatpush.bf16.msra.mxu0 0
    %1498 = vmatpush.bf16.msra.mxu0 0
    %1499 = vmatpush.bf16.msra.mxu0 0
    %1500 = vmatpush.bf16.msra.mxu0 0
    %1501 = vmatpush.bf16.msra.mxu0 0
    %1502 = vmatpush.bf16.msra.mxu0 %v1493
    %1503 = vmatmul.bf16.gmra.mxu0 %v1490
    %v1504 = vpop.f32.mrf.mxu0
    %v1505 = vadd.f32 0.0, %v1504
    %v1506 = vpop.f32.mrf.mxu0
    %1507 = vdwg.mxu0
    %1510 = vrot.lane.b32.xlu0 %v1256, 8
    %v1511 = vpop.permute.xlu0 %1510
    %1512 = vrot.lane.b32.xlu0 %v1277, 8
    %v1513 = vpop.permute.xlu0 %1512
    %1518 = vrot.lane.b32.xlu0 %v1370, 16
    %v1519 = vpop.permute.xlu0 %1518
    %1520 = vrot.lane.b32.xlu0 %v1391, 16
    %v1521 = vpop.permute.xlu0 %1520
    %1526 = vrot.lane.b32.xlu0 %v1484, 24
    %v1527 = vpop.permute.xlu0 %1526
    %1528 = vrot.lane.b32.xlu0 %v1505, 24
    %v1529 = vpop.permute.xlu0 %1528
    %v1532 = vsel %vm184, %v1136, %v1511
    %v1533 = vsel %vm184, %v1157, %v1513
    %v1534 = vsel %vm673, %v1532, %v1519
    %v1535 = vsel %vm673, %v1533, %v1521
    %v1536 = vsel %vm676, %v1534, %v1527
    %v1537 = vsel %vm676, %v1535, %v1529
    %v1538 = vpack.c.bf16 %v1537, %v1536
    %s1539 = scalar_lea.vmem %s6, 16
    %v1540 = vld [vmem:[%s1539] sm:$0xf]
    %v1541 = vld [vmem:[%s1539 + $0x4] sm:$0xf]
    %v1542 = vld [vmem:[%s1539 + $0x8] sm:$0xf]
    %v1543 = vld [vmem:[%s1539 + $0xc] sm:$0xf]
    %s1544 = scalar_lea.vmem %s7, 1
    %v1545 = vld [vmem:[%s1544] sm:$0x1]
    %v1547 = vperm.slane %v1545, 0
    %v1553 = vunpack.c.l.b16 %v1540
    %v1554 = vunpack.c.l.b16 %v1541
    %v1555 = vunpack.c.l.b16 %v1542
    %v1556 = vunpack.c.l.b16 %v1543
    %v1557 = vpack.c.b16 %v1554, %v1553
    %v1558 = vpack.c.b16 %v1556, %v1555
    %v1562 = vsel %vm73, %v1538, 0
    %1564 = vmatpush.bf16.msra.mxu0 0
    %1565 = vmatpush.bf16.msra.mxu0 0
    %1566 = vmatpush.bf16.msra.mxu0 0
    %1567 = vmatpush.bf16.msra.mxu0 0
    %1568 = vmatpush.bf16.msra.mxu0 0
    %1569 = vmatpush.bf16.msra.mxu0 0
    %1570 = vmatpush.bf16.msra.mxu0 %v1558
    %1571 = vmatpush.bf16.msra.mxu0 %v1557
    %1572 = vmatmul.bf16.gmra.mxu0 %v1562
    %v1573 = vpop.f32.mrf.mxu0
    %v1574 = vadd.f32 %v1547, %v1573
    %v1575 = vpop.f32.mrf.mxu0
    %v1576 = vadd.f32 %v1547, %v1575
    %1577 = vdwg.mxu0
    %v1578 = vadd.f32 %v938, %v1574
    %v1579 = vadd.f32 %v939, %v1576
    %s1580 = scalar_lea.vmem %s8, 1
    %v1581 = vld [vmem:[%s1580] sm:$0x1]
    %s1582 = scalar_lea.vmem %s9, 1
    %v1583 = vld [vmem:[%s1582] sm:$0x1]
    %v1584 = vsel %vm73, %v1578, 0.0
    %1585 = vadd.xlane.f32.xlu0 %v1584
    %v1586 = vpop.xlane.xlu0 %1585
    %v1587 = vsel %vm73, %v1579, 0.0
    %1588 = vadd.xlane.f32.xlu0 %v1587
    %v1589 = vpop.xlane.xlu0 %1588
    %v1590 = vmul.f32 %v1586, %v86
    %v1591 = vmul.f32 %v1589, %v86
    %v1592 = vsub.f32 %v1578, %v1590
    %v1593 = vsub.f32 %v1579, %v1591
    %v1594 = vmul.f32 %v1592, %v1592
    %v1595 = vmul.f32 %v1593, %v1593
    %v1596 = vsel %vm73, %v1594, 0.0
    %1597 = vadd.xlane.f32.xlu0 %v1596
    %v1598 = vpop.xlane.xlu0 %1597
    %v1599 = vsel %vm73, %v1595, 0.0
    %1600 = vadd.xlane.f32.xlu0 %v1599
    %v1601 = vpop.xlane.xlu0 %1600
    %v1602 = vmul.f32 %v1598, %v86
    %v1603 = vmul.f32 %v1601, %v86
    %v1604 = vadd.f32 %v1602, 1e-05
    %v1605 = vadd.f32 %v1603, 1e-05
    %v1606 = vrsqrt.pop %v1604
    %v1607 = vmul.f32 %v1606, %v1604
    %v1608 = vmul.f32 %v1607, %v1606
    %v1609 = vmul.f32 0.5, %v1608
    %v1610 = vsub.f32 1.5, %v1609
    %v1611 = vmul.f32 %v1606, %v1610
    %vm1612 = vweird.f32 %v1604
    %vm1613 = vweird.f32 %v1606
    %vm1614 = vmor %vm1612, %vm1613
    %v1615 = vsel %vm1614, %v1606, %v1611
    %v1616 = vrsqrt.pop %v1605
    %v1617 = vmul.f32 %v1616, %v1605
    %v1618 = vmul.f32 %v1617, %v1616
    %v1619 = vmul.f32 0.5, %v1618
    %v1620 = vsub.f32 1.5, %v1619
    %v1621 = vmul.f32 %v1616, %v1620
    %vm1622 = vweird.f32 %v1605
    %vm1623 = vweird.f32 %v1616
    %vm1624 = vmor %vm1622, %vm1623
    %v1625 = vsel %vm1624, %v1616, %v1621
    %v1626 = vmul.f32 %v1592, %v1615
    %v1627 = vmul.f32 %v1593, %v1625
    %v1629 = vperm.slane %v1581, 0
    %v1631 = vmul.f32 %v1626, %v1629
    %v1632 = vmul.f32 %v1627, %v1629
    %v1634 = vperm.slane %v1583, 0
    %v1636 = vadd.f32 %v1631, %v1634
    %v1637 = vadd.f32 %v1632, %v1634
    %v1638 = vpack.c.bf16 %v1637, %v1636
    %s1639 = scalar_lea.vmem %s10, 16
    %v1640 = vld [vmem:[%s1639] sm:$0xf]
    %v1641 = vld [vmem:[%s1639 + $0x4] sm:$0xf]
    %v1642 = vld [vmem:[%s1639 + $0x8] sm:$0xf]
    %v1643 = vld [vmem:[%s1639 + $0xc] sm:$0xf]
    %s1644 = scalar_lea.vmem %s11, 1
    %v1645 = vld [vmem:[%s1644] sm:$0x1]
    %v1647 = vperm.slane %v1645, 0
    %v1653 = vunpack.c.l.b16 %v1640
    %v1654 = vunpack.c.l.b16 %v1641
    %v1655 = vunpack.c.l.b16 %v1642
    %v1656 = vunpack.c.l.b16 %v1643
    %v1657 = vpack.c.b16 %v1654, %v1653
    %v1658 = vpack.c.b16 %v1656, %v1655
    %v1662 = vsel %vm73, %v1638, 0
    %1664 = vmatpush.bf16.msra.mxu0 0
    %1665 = vmatpush.bf16.msra.mxu0 0
    %1666 = vmatpush.bf16.msra.mxu0 0
    %1667 = vmatpush.bf16.msra.mxu0 0
    %1668 = vmatpush.bf16.msra.mxu0 0
    %1669 = vmatpush.bf16.msra.mxu0 0
    %1670 = vmatpush.bf16.msra.mxu0 %v1658
    %1671 = vmatpush.bf16.msra.mxu0 %v1657
    %1672 = vmatmul.bf16.gmra.mxu0 %v1662
    %v1673 = vpop.f32.mrf.mxu0
    %v1674 = vadd.f32 %v1647, %v1673
    %v1675 = vpop.f32.mrf.mxu0
    %v1676 = vadd.f32 %v1647, %v1675
    %1677 = vdwg.mxu0
    %v1678 = vmul.f32 %v1674, 1.702
    %v1679 = vmul.f32 %v1676, 1.702
    %v1680 = vxor.u32 %v1678, 2147483648
    %v1681 = vxor.u32 %v1679, 2147483648
    %v1682 = vmul.f32 %v1680, 1.442695
    %v1683 = vpow.pop %v1682
    %v1684 = vmul.f32 %v1681, 1.442695
    %v1685 = vpow.pop %v1684
    %v1686 = vadd.f32 %v1683, 1.0
    %v1687 = vadd.f32 %v1685, 1.0
    %v1688 = vrcp.pop %v1686
    %v1689 = vmul.f32 %v1686, %v1688
    %v1690 = vsub.f32 1.0, %v1689
    %v1691 = vmul.f32 %v1688, %v1690
    %v1692 = vadd.f32 %v1688, %v1691
    %vm1693 = vweird.f32 %v1686
    %vm1694 = vweird.f32 %v1688
    %vm1695 = vmor %vm1693, %vm1694
    %v1696 = vsel %vm1695, %v1688, %v1692
    %v1697 = vand.u32 2147483647, %v1686
    %vm1698 = vcmp.eq.f32.partialorder %v1697, 8.507059e+37
    %v1699 = vand.u32 %v1686, 2147483648
    %v1700 = vor.u32 1.1754944e-38, %v1699
    %v1701 = vsel %vm1698, %v1700, %v1696
    %v1702 = vmul.f32 1.0, %v1701
    %v1703 = vrcp.pop %v1687
    %v1704 = vmul.f32 %v1687, %v1703
    %v1705 = vsub.f32 1.0, %v1704
    %v1706 = vmul.f32 %v1703, %v1705
    %v1707 = vadd.f32 %v1703, %v1706
    %vm1708 = vweird.f32 %v1687
    %vm1709 = vweird.f32 %v1703
    %vm1710 = vmor %vm1708, %vm1709
    %v1711 = vsel %vm1710, %v1703, %v1707
    %v1712 = vand.u32 2147483647, %v1687
    %vm1713 = vcmp.eq.f32.partialorder %v1712, 8.507059e+37
    %v1714 = vand.u32 %v1687, 2147483648
    %v1715 = vor.u32 1.1754944e-38, %v1714
    %v1716 = vsel %vm1713, %v1715, %v1711
    %v1717 = vmul.f32 1.0, %v1716
    %v1718 = vmul.f32 %v1674, %v1702
    %v1719 = vmul.f32 %v1676, %v1717
    %v1720 = vpack.c.bf16 %v1719, %v1718
    %s1721 = scalar_lea.vmem %s12, 64
    %v1722 = vld [vmem:[%s1721] sm:$0xf]
    %v1723 = vld [vmem:[%s1721 + $0x4] sm:$0xf]
    %v1724 = vld [vmem:[%s1721 + $0x8] sm:$0xf]
    %v1725 = vld [vmem:[%s1721 + $0xc] sm:$0xf]
    %v1726 = vld [vmem:[%s1721 + $0x10] sm:$0xf]
    %v1727 = vld [vmem:[%s1721 + $0x14] sm:$0xf]
    %v1728 = vld [vmem:[%s1721 + $0x18] sm:$0xf]
    %v1729 = vld [vmem:[%s1721 + $0x1c] sm:$0xf]
    %v1730 = vld [vmem:[%s1721 + $0x20] sm:$0xf]
    %v1731 = vld [vmem:[%s1721 + $0x24] sm:$0xf]
    %v1732 = vld [vmem:[%s1721 + $0x28] sm:$0xf]
    %v1733 = vld [vmem:[%s1721 + $0x2c] sm:$0xf]
    %v1734 = vld [vmem:[%s1721 + $0x30] sm:$0xf]
    %v1735 = vld [vmem:[%s1721 + $0x34] sm:$0xf]
    %v1736 = vld [vmem:[%s1721 + $0x38] sm:$0xf]
    %v1737 = vld [vmem:[%s1721 + $0x3c] sm:$0xf]
    %s1738 = scalar_lea.vmem %s13, 1
    %v1739 = vld [vmem:[%s1738] sm:$0x1]
    %v1741 = vperm.slane %v1739, 0
    %v1759 = vunpack.c.l.b16 %v1722
    %v1760 = vunpack.c.l.b16 %v1723
    %v1761 = vunpack.c.l.b16 %v1724
    %v1762 = vunpack.c.l.b16 %v1725
    %v1763 = vunpack.c.l.b16 %v1726
    %v1764 = vunpack.c.l.b16 %v1727
    %v1765 = vunpack.c.l.b16 %v1728
    %v1766 = vunpack.c.l.b16 %v1729
    %v1767 = vunpack.c.l.b16 %v1730
    %v1768 = vunpack.c.l.b16 %v1731
    %v1769 = vunpack.c.l.b16 %v1732
    %v1770 = vunpack.c.l.b16 %v1733
    %v1771 = vunpack.c.l.b16 %v1734
    %v1772 = vunpack.c.l.b16 %v1735
    %v1773 = vunpack.c.l.b16 %v1736
    %v1774 = vunpack.c.l.b16 %v1737
    %v1775 = vpack.c.b16 %v1760, %v1759
    %v1776 = vpack.c.b16 %v1762, %v1761
    %v1777 = vpack.c.b16 %v1764, %v1763
    %v1778 = vpack.c.b16 %v1766, %v1765
    %v1779 = vpack.c.b16 %v1768, %v1767
    %v1780 = vpack.c.b16 %v1770, %v1769
    %v1781 = vpack.c.b16 %v1772, %v1771
    %v1782 = vpack.c.b16 %v1774, %v1773
    %1791 = vmatpush.bf16.msra.mxu0 %v1782
    %1792 = vmatpush.bf16.msra.mxu0 %v1781
    %1793 = vmatpush.bf16.msra.mxu0 %v1780
    %1794 = vmatpush.bf16.msra.mxu0 %v1779
    %1795 = vmatpush.bf16.msra.mxu0 %v1778
    %1796 = vmatpush.bf16.msra.mxu0 %v1777
    %1797 = vmatpush.bf16.msra.mxu0 %v1776
    %1798 = vmatpush.bf16.msra.mxu0 %v1775
    %1799 = vmatmul.bf16.gmra.mxu0 %v1720
    %v1800 = vpop.f32.mrf.mxu0
    %v1801 = vadd.f32 %v1741, %v1800
    %v1802 = vpop.f32.mrf.mxu0
    %v1803 = vadd.f32 %v1741, %v1802
    %1804 = vdwg.mxu0
    %v1805 = vadd.f32 %v1578, %v1801
    %v1806 = vadd.f32 %v1579, %v1803
    %vm1807 = vcmp.eq.s32.totalorder %v67, 0
    %s1808 = sld [smem:[#allocation3]]
    %v1809 = vstv %s1808
    %vm1810 = vcmp.eq.s32.totalorder %v69, %v1809
    %vm1811 = vmand %vm1807, %vm1810
    %vm1812 = vcmp.eq.s32.totalorder %v67, 1
    %s1813 = sld [smem:[#allocation3 + $0x1]]
    %s1814 = sadd.s32 %s1813, 8
    %v1815 = vstv %s1814
    %vm1816 = vcmp.eq.s32.totalorder %v69, %v1815
    %vm1817 = vmand %vm1812, %vm1816
    %vm1818 = vmor %vm1811, %vm1817
    %v1819 = vsel %vm1818, 1, 0
    %v1820 = vcvt.s32.f32 %v1819
    %v1821 = vpack.c.bf16 %v1820, %v1820
    %v1822 = vpack.c.bf16 %v1806, %v1805
    %v1824 = vsel %vm673, %v1821, 0
    %1826 = vmatpush.bf16.msra.mxu0 0
    %1827 = vmatpush.bf16.msra.mxu0 0
    %1828 = vmatpush.bf16.msra.mxu0 0
    %1829 = vmatpush.bf16.msra.mxu0 0
    %1830 = vmatpush.bf16.msra.mxu0 0
    %1831 = vmatpush.bf16.msra.mxu0 0
    %1832 = vmatpush.bf16.msra.mxu0 0
    %1833 = vmatpush.bf16.msra.mxu0 %v1822
    %1834 = vmatmul.bf16.gmra.mxu0 %v1824
    %v1835 = vpop.f32.mrf.mxu0
    %v1836 = vadd.f32 0.0, %v1835
    %v1837 = vpop.f32.mrf.mxu0
    %1838 = vdwg.mxu0
    %v1839 = vld [vmem:[%s14] sm:$0x1]
    %v1840 = vld [vmem:[%s15] sm:$0x1]
    %vm1841 = vcmask 254976
    %v1842 = vsel %vm1841, %v1836, 0.0
    %1843 = vadd.xlane.f32.xlu0 %v1842
    %v1844 = vpop.xlane.xlu0 %1843
    %v1845 = vmul.f32 %v1844, %v86
    %v1846 = vsub.f32 %v1836, %v1845
    %v1847 = vmul.f32 %v1846, %v1846
    %v1848 = vsel %vm1841, %v1847, 0.0
    %1849 = vadd.xlane.f32.xlu0 %v1848
    %v1850 = vpop.xlane.xlu0 %1849
    %v1851 = vmul.f32 %v1850, %v86
    %v1852 = vadd.f32 %v1851, 1e-05
    %v1853 = vrsqrt.pop %v1852
    %v1854 = vmul.f32 %v1853, %v1852
    %v1855 = vmul.f32 %v1854, %v1853
    %v1856 = vmul.f32 0.5, %v1855
    %v1857 = vsub.f32 1.5, %v1856
    %v1858 = vmul.f32 %v1853, %v1857
    %vm1859 = vweird.f32 %v1852
    %vm1860 = vweird.f32 %v1853
    %vm1861 = vmor %vm1859, %vm1860
    %v1862 = vsel %vm1861, %v1853, %v1858
    %v1863 = vmul.f32 %v1846, %v1862
    %v1865 = vperm.slane %v1839, 0
    %v1867 = vmul.f32 %v1863, %v1865
    %v1869 = vperm.slane %v1840, 0
    %v1871 = vadd.f32 %v1867, %v1869
    %v1872 = vpack.c.bf16 %v1871, %v1871
    %v1873 = vld [vmem:[%s16] sm:$0xf]
    %v1874 = vld [vmem:[%s16 + $0x4] sm:$0xf]
    %v1875 = vld [vmem:[%s16 + $0x8] sm:$0xf]
    %v1876 = vld [vmem:[%s16 + $0xc] sm:$0xf]
    %v1881 = vunpack.c.l.b16 %v1873
    %v1882 = vunpack.c.l.b16 %v1874
    %v1883 = vunpack.c.l.b16 %v1875
    %v1884 = vunpack.c.l.b16 %v1876
    %v1885 = vpack.c.b16 %v1882, %v1881
    %v1886 = vpack.c.b16 %v1884, %v1883
    %v1890 = vsel %vm73, %v1872, 0
    %1892 = vmatpush.bf16.msra.mxu0 0
    %1893 = vmatpush.bf16.msra.mxu0 0
    %1894 = vmatpush.bf16.msra.mxu0 0
    %1895 = vmatpush.bf16.msra.mxu0 0
    %1896 = vmatpush.bf16.msra.mxu0 0
    %1897 = vmatpush.bf16.msra.mxu0 0
    %1898 = vmatpush.bf16.msra.mxu0 %v1886
    %1899 = vmatpush.bf16.msra.mxu0 %v1885
    %1900 = vmatmul.bf16.gmra.mxu0 %v1890
    %v1901 = vpop.f32.mrf.mxu0
    %v1902 = vadd.f32 0.0, %v1901
    %v1903 = vpop.f32.mrf.mxu0
    %1904 = vdwg.mxu0
    %1905 = vst [vmem:[#allocation4] sm:$0x3] %v1902
    // Predicated region
    $region66: #{get_text_features.1} parent=1 // pred_check
      _
    $region67: #{get_text_features.1} parent=1 // pred_check_branch
      %1907 = sbr.rel (0) target = $region69
    $region68: #{get_text_features.1} parent=1 // pred_region
      %1909 = vsyncadd [#allocation5], 0
      %s1911 = sshll.u32 [#allocation4], 4
      %s1912 = int_to_ptr.vmem [resolvable:$true] %s1911
      %s1913 = sshll.u32 %s17, 4
      %s1914 = int_to_ptr.hbm [resolvable:$true] %s1913
      %1916 = dma.vmem_to_hbm [thread:$0]  %s1912, 32, %s1914, [#allocation5]
    $region69: #{get_text_features.1} parent=1 // pred_fallthru
      _
    // Predicated region
    $region70: #{get_text_features.1} parent=1 // pred_check
      _
    $region71: #{get_text_features.1} parent=1 // pred_check_branch
      %1918 = sbr.rel (0) target = $region73
    $region72: #{get_text_features.1} parent=1 // pred_region
      %1920 = dma.done [#allocation5], 32
    $region73: #{get_text_features.1} parent=1 // pred_fallthru
      _
    %1921 = vsyncpa [#allocation5], 1

</llo_original>
